<compile_context>
chip_gen: v5e
topology: v5e:2x2
jax: 0.10.0
libtpu: 0.0.40
codegen_flags: <defaults>
</compile_context>

<pallas_src>
import math
import functools

import jax
import jax.numpy as jnp
from jax import lax
from jax.experimental import pallas as pl
from jax.experimental.pallas import tpu as pltpu


def _round_up(x, m):
    return ((x + m - 1) // m) * m


# ----------------------------------------------------------------------------
# Fused kernel: aggregation + on-the-fly feature transform + bias + inductive
# skip + LayerNorm.  grid = (row tiles i, aggregation tiles k).
# out_ref doubles as the fp32 accumulator (its block index is constant in k).
# ----------------------------------------------------------------------------
def _gcn_fused_kernel(adj_ref, xk_ref, xi_ref, wconv_ref, wlin_ref, params_ref,
                      out_ref, *, use_lin: bool, use_norm: bool,
                      ln_eps: float, out_ch: int):
    k = pl.program_id(1)

    @pl.when(k == 0)
    def _():
        out_ref[...] = jnp.zeros_like(out_ref)

    # Fused "Stage 1": H_k = X_k @ W_conv (fp32 on MXU), cast to bf16 so the
    # aggregation matmul runs bf16 x bf16 with fp32 accumulation.
    h_k = jnp.dot(xk_ref[...], wconv_ref[...],
                  preferred_element_type=jnp.float32)
    out_ref[...] += jnp.dot(adj_ref[...], h_k.astype(jnp.bfloat16),
                            preferred_element_type=jnp.float32)

    @pl.when(k == pl.num_programs(1) - 1)
    def _():
        p = params_ref[...]            # rows: b_conv, b_lin, gamma, beta, 0...
        y = out_ref[...] + p[0:1, :]                          # GCNConv bias
        if use_lin:                                           # inductive skip
            y = y + jnp.dot(xi_ref[...], wlin_ref[...],
                            preferred_element_type=jnp.float32) + p[1:2, :]
        if use_norm:                                          # LayerNorm(out_ch)
            # Statistics over the real out_ch lanes only (lanes >= out_ch are
            # zero padding and must not contribute to mean/var).
            lanes = lax.broadcasted_iota(jnp.int32, y.shape, 1)
            mask = lanes < out_ch
            inv_n = 1.0 / float(out_ch)
            mean = jnp.sum(jnp.where(mask, y, 0.0), axis=-1,
                           keepdims=True) * inv_n
            c = jnp.where(mask, y - mean, 0.0)
            var = jnp.sum(c * c, axis=-1, keepdims=True) * inv_n
            y = c * lax.rsqrt(var + ln_eps) * p[2:3, :] + p[3:4, :]
        out_ref[...] = y.astype(out_ref.dtype)


class GeneralConvPallas:
    """Pallas TPU implementation of GeneralConv (gcn_conv branch, forward)."""

    def __init__(self, task, conv_name, in_channels, out_channels,
                 self_node=True, norm='LayerNorm', n_heads=(1, 1),
                 iscat=(False, False), dropout=0.0, tile_n=512, key=None):
        if conv_name != 'gcn_conv':
            # TODO(synk): sage_conv / gat_conv not translated to Pallas.
            raise NotImplementedError(f"conv_name={conv_name!r} not supported")
        if norm == 'None':
            self.use_norm = False
        elif norm == 'LayerNorm':
            self.use_norm = True
        else:
            # TODO(synk): BatchNorm1d (running stats) not implemented.
            raise NotImplementedError(f"norm={norm!r} not supported")

        self.task = task
        self.in_channels = in_channels
        self.out_channels = out_channels
        self.self_node = bool(self_node)
        self.tile_n = int(tile_n)      # multiple of 128; 512-1024 for big N
        self.ln_eps = 1e-5

        if key is None:
            key = jax.random.PRNGKey(0)
        kwc, kbc, kwl, kbl = jax.random.split(key, 4)
        bound = 1.0 / math.sqrt(in_channels)
        # Weights stored as [in, out] (transposed vs torch's [out, in]).
        self.w_conv = jax.random.uniform(kwc, (in_channels, out_channels),
                                         jnp.float32, minval=-bound, maxval=bound)
        self.b_conv = jax.random.uniform(kbc, (1, out_channels), jnp.float32,
                                         minval=-bound, maxval=bound)
        if task == 'inductive':
            self.w_lin = jax.random.uniform(kwl, (in_channels, out_channels),
                                            jnp.float32, minval=-bound, maxval=bound)
            self.b_lin = jax.random.uniform(kbl, (1, out_channels), jnp.float32,
                                            minval=-bound, maxval=bound)
        else:
            self.w_lin = jnp.zeros((in_channels, out_channels), jnp.float32)
            self.b_lin = jnp.zeros((1, out_channels), jnp.float32)
        # LayerNorm affine params (torch defaults: gamma=1, beta=0).
        self.gamma = jnp.ones((1, out_channels), jnp.float32)
        self.beta = jnp.zeros((1, out_channels), jnp.float32)

        # Lane-dense padded copies (out_ch -> multiple of 128, zero columns).
        self.out_pad = _round_up(out_channels, 128)
        pad_c = self.out_pad - out_channels
        self.w_conv_p = jnp.pad(self.w_conv, ((0, 0), (0, pad_c)))
        self.w_lin_p = jnp.pad(self.w_lin, ((0, 0), (0, pad_c)))
        params = jnp.zeros((8, self.out_pad), jnp.float32)
        params = params.at[0, :out_channels].set(self.b_conv[0])
        params = params.at[1, :out_channels].set(self.b_lin[0])
        params = params.at[2, :out_channels].set(self.gamma[0])
        params = params.at[3, :out_channels].set(self.beta[0])
        self.params_pack = params

    # Graph preprocessing (sparse edge_index -> dense normalized adjacency).
    # NOTE: deg is the row-sum (in-degree); matches PyG gcn_norm for
    # undirected / symmetrized edge_index.
    def _normalized_adjacency(self, n, edge_index):
        src = edge_index[0]
        dst = edge_index[1]
        a = jnp.zeros((n, n), jnp.float32).at[dst, src].add(1.0)
        if self.self_node:
            a = a + jnp.eye(n, dtype=jnp.float32)
        deg = jnp.sum(a, axis=1)
        dinv = jnp.where(deg > 0.0, lax.rsqrt(deg), 0.0)
        return a * dinv[:, None] * dinv[None, :]

    def __call__(self, x, edge_index):
        n, in_ch = x.shape
        out_ch = self.out_channels
        out_pad = self.out_pad
        tile = self.tile_n
        n_tiles = pl.cdiv(n, tile)
        n_pad = n_tiles * tile

        adj = self._normalized_adjacency(n, edge_index)
        adj = jnp.pad(adj, ((0, n_pad - n), (0, n_pad - n))).astype(jnp.bfloat16)
        x_pad = jnp.pad(x.astype(jnp.float32), ((0, n_pad - n), (0, 0)))

        kernel = functools.partial(
            _gcn_fused_kernel,
            use_lin=(self.task == 'inductive'),
            use_norm=self.use_norm,
            ln_eps=self.ln_eps,
            out_ch=out_ch,
        )

        # Double-buffered VMEM footprint -> explicit scoped limit with
        # headroom (capped at 64 MiB so a tile that fits v5e/v6e does not
        # silently overshoot v7x's physical VMEM).
        footprint = 2 * (tile * tile * 2            # adj (bf16)
                         + 2 * tile * in_ch * 4     # X_k, X_i
                         + 2 * in_ch * out_pad * 4  # W_conv, W_lin
                         + 8 * out_pad * 4          # packed params
                         + tile * out_pad * 4)      # out / accumulator block
        vmem_limit = int(min(64 * 2**20, max(32 * 2**20, 2 * footprint)))

        cost = pl.CostEstimate(
            flops=(2 * n_pad * n_pad * out_pad
                   + 2 * n_tiles * n_pad * in_ch * out_pad
                   + 2 * n_pad * in_ch * out_pad),
            transcendentals=n_pad,
            bytes_accessed=(2 * n_pad * n_pad                 # bf16 adjacency
                            + 4 * n_tiles * n_pad * in_ch     # X re-reads
                            + 4 * n_pad * out_pad             # output
                            + 8 * in_ch * out_pad),
        )

        out = pl.pallas_call(
            kernel,
            out_shape=jax.ShapeDtypeStruct((n_pad, out_pad), jnp.float32),
            grid_spec=pltpu.PrefetchScalarGridSpec(
                num_scalar_prefetch=0,
                grid=(n_tiles, n_tiles),
                in_specs=[
                    pl.BlockSpec((tile, tile),     lambda i, k: (i, k)),  # A_hat
                    pl.BlockSpec((tile, in_ch),    lambda i, k: (k, 0)),  # X_k
                    pl.BlockSpec((tile, in_ch),    lambda i, k: (i, 0)),  # X_i
                    pl.BlockSpec((in_ch, out_pad), lambda i, k: (0, 0)),  # W_conv
                    pl.BlockSpec((in_ch, out_pad), lambda i, k: (0, 0)),  # W_lin
                    pl.BlockSpec((8, out_pad),     lambda i, k: (0, 0)),  # params
                ],
                out_specs=pl.BlockSpec((tile, out_pad), lambda i, k: (i, 0)),
            ),
            compiler_params=pltpu.CompilerParams(
                dimension_semantics=("parallel", "arbitrary"),
                vmem_limit_bytes=vmem_limit),
            cost_estimate=cost,
        )(adj, x_pad, x_pad, self.w_conv_p, self.w_lin_p, self.params_pack)

        return out[:n, :out_ch]


def _reference(model, x, edge_index):
    """Pure-JAX fp32 reference matching the PyTorch forward."""
    n = x.shape[0]
    adj = model._normalized_adjacency(n, edge_index)
    y = adj @ (x @ model.w_conv) + model.b_conv
    if model.task == 'inductive':
        y = y + x @ model.w_lin + model.b_lin
    if model.use_norm:
        mean = jnp.mean(y, axis=-1, keepdims=True)
        var = jnp.mean((y - mean) ** 2, axis=-1, keepdims=True)
        y = (y - mean) * lax.rsqrt(var + model.ln_eps) * model.gamma + model.beta
    return y


if __name__ == "__main__":
    key = jax.random.PRNGKey(0)
    k_param, kx, ke = jax.random.split(key, 3)

    # Small graph: 200 nodes, 600 random edges, in=32, out=16.
    # tile_n=128 here so the demo exercises a 2x2 grid (row tiles x k tiles,
    # i.e. the accumulate-across-k path); production default is 512, sweep to
    # 1024 (cap there on v7x: 64 MiB physical VMEM).
    N, IN_CH, OUT_CH, E = 200, 32, 16, 600
    model = GeneralConvPallas(task='inductive', conv_name='gcn_conv',
                              in_channels=IN_CH, out_channels=OUT_CH,
                              self_node=True, norm='LayerNorm',
                              tile_n=128, key=k_param)

    x = jax.random.normal(kx, (N, IN_CH), jnp.float32)
    edge_index = jax.random.randint(ke, (2, E), 0, N, dtype=jnp.int32)

    out = jax.block_until_ready(model(x, edge_index))
    ref = _reference(model, x, edge_index)

    assert out.shape == (N, OUT_CH)
    # Adjacency / H are streamed in bf16 (fp32 accumulation), so tolerance is
    # looser than a pure-fp32 pipeline.
    assert jnp.allclose(out, ref, atol=2e-2, rtol=2e-2), \
        float(jnp.max(jnp.abs(out - ref)))

    print("KERNEL_OK")
</pallas_src>

<mosaic_0001>
module attributes {stable_mosaic.version = 11 : i64} {
  func.func @_gcn_fused_kernel(%arg0: i32, %arg1: i32, %arg2: memref<128x128xbf16, #tpu.memory_space<vmem>>, %arg3: memref<128x32xf32, #tpu.memory_space<vmem>>, %arg4: memref<128x32xf32, #tpu.memory_space<vmem>>, %arg5: memref<32x128xf32, #tpu.memory_space<vmem>>, %arg6: memref<32x128xf32, #tpu.memory_space<vmem>>, %arg7: memref<8x128xf32, #tpu.memory_space<vmem>>, %arg8: memref<128x128xf32, #tpu.memory_space<vmem>>) attributes {dimension_semantics = [#tpu.dimension_semantics<parallel>, #tpu.dimension_semantics<arbitrary>], iteration_bounds = array<i64: 2, 2>, scalar_prefetch = 0 : i64, scratch_operands = 0 : i64, tpu.core_type = #tpu.core_type<tc>, window_params = [{transform_indices = @transform_0, window_bounds = array<i64: 128, 128>}, {transform_indices = @transform_1, window_bounds = array<i64: 128, 32>}, {transform_indices = @transform_2, window_bounds = array<i64: 128, 32>}, {pipeline_mode = #tpu.pipeline_mode<synchronous>, transform_indices = @transform_3, window_bounds = array<i64: 32, 128>}, {pipeline_mode = #tpu.pipeline_mode<synchronous>, transform_indices = @transform_4, window_bounds = array<i64: 32, 128>}, {pipeline_mode = #tpu.pipeline_mode<synchronous>, transform_indices = @transform_5, window_bounds = array<i64: 8, 128>}, {transform_indices = @transform_6, window_bounds = array<i64: 128, 128>}]} {
    %c0_i32 = arith.constant 0 : i32
    %0 = arith.cmpi eq, %arg1, %c0_i32 : i32
    %1 = arith.extui %0 : i1 to i32
    %c0_i32_0 = arith.constant 0 : i32
    %2 = arith.cmpi ne, %1, %c0_i32_0 : i32
    scf.if %2 {
      %cst_12 = arith.constant 0.000000e+00 : f32
      %15 = vector.broadcast %cst_12 : f32 to vector<128x128xf32>
      %c0_13 = arith.constant 0 : index
      %c0_14 = arith.constant 0 : index
      %16 = vector.load %arg8[%c0_13, %c0_14] : memref<128x128xf32, #tpu.memory_space<vmem>>, vector<128x128xf32>
      tpu.vector_store %arg8[%c0_13, %c0_14], %15 {strides = array<i32>} : memref<128x128xf32, #tpu.memory_space<vmem>>, vector<128x128xf32>,
    } else {
    }
    %c0 = arith.constant 0 : index
    %c0_1 = arith.constant 0 : index
    %3 = vector.load %arg3[%c0, %c0_1] : memref<128x32xf32, #tpu.memory_space<vmem>>, vector<128x32xf32>
    %c0_2 = arith.constant 0 : index
    %c0_3 = arith.constant 0 : index
    %4 = vector.load %arg5[%c0_2, %c0_3] : memref<32x128xf32, #tpu.memory_space<vmem>>, vector<32x128xf32>
    %cst = arith.constant dense<0.000000e+00> : vector<128x128xf32>
    %5 = tpu.matmul %3, %4, %cst {dimension_numbers = #tpu.dot_dimension_numbers<[1], [0], [0], [1], [0, 0, 1, 1], [], []>} : vector<128x32xf32>, vector<32x128xf32>, vector<128x128xf32> -> vector<128x128xf32>
    %c0_4 = arith.constant 0 : index
    %c0_5 = arith.constant 0 : index
    %6 = vector.load %arg8[%c0_4, %c0_5] : memref<128x128xf32, #tpu.memory_space<vmem>>, vector<128x128xf32>
    %c0_6 = arith.constant 0 : index
    %c0_7 = arith.constant 0 : index
    %7 = vector.load %arg2[%c0_6, %c0_7] : memref<128x128xbf16, #tpu.memory_space<vmem>>, vector<128x128xbf16>
    %8 = arith.truncf %5 : vector<128x128xf32> to vector<128x128xbf16>
    %cst_8 = arith.constant dense<0.000000e+00> : vector<128x128xf32>
    %9 = tpu.matmul %7, %8, %cst_8 {dimension_numbers = #tpu.dot_dimension_numbers<[1], [0], [0], [1], [0, 0, 1, 1], [], []>} : vector<128x128xbf16>, vector<128x128xbf16>, vector<128x128xf32> -> vector<128x128xf32>
    %10 = arith.addf %6, %9 : vector<128x128xf32>
    %c0_9 = arith.constant 0 : index
    %c0_10 = arith.constant 0 : index
    %11 = vector.load %arg8[%c0_9, %c0_10] : memref<128x128xf32, #tpu.memory_space<vmem>>, vector<128x128xf32>
    tpu.vector_store %arg8[%c0_9, %c0_10], %10 {strides = array<i32>} : memref<128x128xf32, #tpu.memory_space<vmem>>, vector<128x128xf32>,
    %c1_i32 = arith.constant 1 : i32
    %12 = arith.cmpi eq, %arg1, %c1_i32 : i32
    %13 = arith.extui %12 : i1 to i32
    %c0_i32_11 = arith.constant 0 : i32
    %14 = arith.cmpi ne, %13, %c0_i32_11 : i32
    scf.if %14 {
      %c0_12 = arith.constant 0 : index
      %c0_13 = arith.constant 0 : index
      %15 = vector.load %arg7[%c0_12, %c0_13] : memref<8x128xf32, #tpu.memory_space<vmem>>, vector<8x128xf32>
      %c0_14 = arith.constant 0 : index
      %c0_15 = arith.constant 0 : index
      %16 = vector.load %arg8[%c0_14, %c0_15] : memref<128x128xf32, #tpu.memory_space<vmem>>, vector<128x128xf32>
      %17 = vector.extract_strided_slice %15 {offsets = [0, 0], sizes = [1, 128], strides = [1, 1]} : vector<8x128xf32> to vector<1x128xf32>
      %18 = vector.broadcast %17 : vector<1x128xf32> to vector<128x128xf32>
      %19 = arith.addf %16, %18 : vector<128x128xf32>
      %c0_16 = arith.constant 0 : index
      %c0_17 = arith.constant 0 : index
      %20 = vector.load %arg4[%c0_16, %c0_17] : memref<128x32xf32, #tpu.memory_space<vmem>>, vector<128x32xf32>
      %c0_18 = arith.constant 0 : index
      %c0_19 = arith.constant 0 : index
      %21 = vector.load %arg6[%c0_18, %c0_19] : memref<32x128xf32, #tpu.memory_space<vmem>>, vector<32x128xf32>
      %cst_20 = arith.constant dense<0.000000e+00> : vector<128x128xf32>
      %22 = tpu.matmul %20, %21, %cst_20 {dimension_numbers = #tpu.dot_dimension_numbers<[1], [0], [0], [1], [0, 0, 1, 1], [], []>} : vector<128x32xf32>, vector<32x128xf32>, vector<128x128xf32> -> vector<128x128xf32>
      %23 = arith.addf %19, %22 : vector<128x128xf32>
      %24 = vector.extract_strided_slice %15 {offsets = [1, 0], sizes = [1, 128], strides = [1, 1]} : vector<8x128xf32> to vector<1x128xf32>
      %25 = vector.broadcast %24 : vector<1x128xf32> to vector<128x128xf32>
      %26 = arith.addf %23, %25 : vector<128x128xf32>
      %27 = tpu.iota {dimensions = array<i32: 1>} : vector<128x128xi32>
      %c16_i32 = arith.constant 16 : i32
      %28 = vector.broadcast %c16_i32 : i32 to vector<128x128xi32>
      %29 = arith.cmpi slt, %27, %28 : vector<128x128xi32>
      %cst_21 = arith.constant 0.000000e+00 : f32
      %30 = vector.broadcast %cst_21 : f32 to vector<128x128xf32>
      %31 = arith.select %29, %26, %30 : vector<128x128xi1>, vector<128x128xf32>
      %cst_22 = arith.constant dense<0.000000e+00> : vector<128xf32>
      %32 = vector.multi_reduction <add>, %31, %cst_22 [1] : vector<128x128xf32> to vector<128xf32>
      %33 = vector.shape_cast %32 : vector<128xf32> to vector<128x1xf32>
      %cst_23 = arith.constant 6.250000e-02 : f32
      %34 = vector.broadcast %cst_23 : f32 to vector<128x1xf32>
      %35 = arith.mulf %33, %34 : vector<128x1xf32>
      %36 = vector.broadcast %35 : vector<128x1xf32> to vector<128x128xf32>
      %37 = arith.subf %26, %36 : vector<128x128xf32>
      %cst_24 = arith.constant 0.000000e+00 : f32
      %38 = vector.broadcast %cst_24 : f32 to vector<128x128xf32>
      %39 = arith.select %29, %37, %38 : vector<128x128xi1>, vector<128x128xf32>
      %40 = arith.mulf %39, %39 : vector<128x128xf32>
      %cst_25 = arith.constant dense<0.000000e+00> : vector<128xf32>
      %41 = vector.multi_reduction <add>, %40, %cst_25 [1] : vector<128x128xf32> to vector<128xf32>
      %42 = vector.shape_cast %41 : vector<128xf32> to vector<128x1xf32>
      %cst_26 = arith.constant 6.250000e-02 : f32
      %43 = vector.broadcast %cst_26 : f32 to vector<128x1xf32>
      %44 = arith.mulf %42, %43 : vector<128x1xf32>
      %cst_27 = arith.constant 9.99999974E-6 : f32
      %45 = vector.broadcast %cst_27 : f32 to vector<128x1xf32>
      %46 = arith.addf %44, %45 : vector<128x1xf32>
      %47 = math.rsqrt %46 : vector<128x1xf32>
      %48 = vector.broadcast %47 : vector<128x1xf32> to vector<128x128xf32>
      %49 = arith.mulf %39, %48 : vector<128x128xf32>
      %50 = vector.extract_strided_slice %15 {offsets = [2, 0], sizes = [1, 128], strides = [1, 1]} : vector<8x128xf32> to vector<1x128xf32>
      %51 = vector.broadcast %50 : vector<1x128xf32> to vector<128x128xf32>
      %52 = arith.mulf %49, %51 : vector<128x128xf32>
      %53 = vector.extract_strided_slice %15 {offsets = [3, 0], sizes = [1, 128], strides = [1, 1]} : vector<8x128xf32> to vector<1x128xf32>
      %54 = vector.broadcast %53 : vector<1x128xf32> to vector<128x128xf32>
      %55 = arith.addf %52, %54 : vector<128x128xf32>
      %c0_28 = arith.constant 0 : index
      %c0_29 = arith.constant 0 : index
      %56 = vector.load %arg8[%c0_28, %c0_29] : memref<128x128xf32, #tpu.memory_space<vmem>>, vector<128x128xf32>
      tpu.vector_store %arg8[%c0_28, %c0_29], %55 {strides = array<i32>} : memref<128x128xf32, #tpu.memory_space<vmem>>, vector<128x128xf32>,
    } else {
    }
    return
  }
  func.func @transform_0(%arg0: i32, %arg1: i32) -> (i32, i32) {
    %c0_i32 = arith.constant 0 : i32
    return %arg0, %arg1 : i32, i32
  }
  func.func @transform_1(%arg0: i32, %arg1: i32) -> (i32, i32) {
    %c0_i32 = arith.constant 0 : i32
    %c0_i32_0 = arith.constant 0 : i32
    return %arg1, %c0_i32 : i32, i32
  }
  func.func @transform_2(%arg0: i32, %arg1: i32) -> (i32, i32) {
    %c0_i32 = arith.constant 0 : i32
    %c0_i32_0 = arith.constant 0 : i32
    return %arg0, %c0_i32 : i32, i32
  }
  func.func @transform_3(%arg0: i32, %arg1: i32) -> (i32, i32) {
    %c0_i32 = arith.constant 0 : i32
    %c0_i32_0 = arith.constant 0 : i32
    %c0_i32_1 = arith.constant 0 : i32
    return %c0_i32, %c0_i32_0 : i32, i32
  }
  func.func @transform_4(%arg0: i32, %arg1: i32) -> (i32, i32) {
    %c0_i32 = arith.constant 0 : i32
    %c0_i32_0 = arith.constant 0 : i32
    %c0_i32_1 = arith.constant 0 : i32
    return %c0_i32, %c0_i32_0 : i32, i32
  }
  func.func @transform_5(%arg0: i32, %arg1: i32) -> (i32, i32) {
    %c0_i32 = arith.constant 0 : i32
    %c0_i32_0 = arith.constant 0 : i32
    %c0_i32_1 = arith.constant 0 : i32
    return %c0_i32, %c0_i32_0 : i32, i32
  }
  func.func @transform_6(%arg0: i32, %arg1: i32) -> (i32, i32) {
    %c0_i32 = arith.constant 0 : i32
    %c0_i32_0 = arith.constant 0 : i32
    return %arg0, %c0_i32 : i32, i32
  }
}

</mosaic_0001>

<llo_original>
// kernel: tpu_custom_call.1
$region0: #{tpu_custom_call.1}
  #allocation0 [shape = 'u32[]', space=smem, size = 0x4, offset = 0x4, fixed_abs, tag = 'smem constant byte address 0x4 - core index']
  #allocation1 [shape = 'u32[72,128]{1,0:T(1,128)}', space=vmem, size = 0x9000, scoped, tag = 'internal scratch']
  %s0 = inlined_call_operand.vmem [shape: bf16[256,256], index: 0, kind: input, shape index: {}]
  %s1 = inlined_call_operand.vmem [shape: f32[256,32], index: 1, kind: input, shape index: {}]
  %s2 = inlined_call_operand.vmem [shape: f32[256,32], index: 2, kind: input, shape index: {}]
  %s3 = inlined_call_operand.vmem [shape: f32[32,128], index: 3, kind: input, shape index: {}]
  %s4 = inlined_call_operand.vmem [shape: f32[32,128], index: 4, kind: input, shape index: {}]
  %s5 = inlined_call_operand.vmem [shape: f32[8,128], index: 5, kind: input, shape index: {}]
  %s6 = inlined_call_operand.hbm [shape: f32[256,128], index: 6, kind: output, shape index: {}]
  %s7 = sld [smem:[#allocation0]]
  $region106: #{tpu_custom_call.1} parent=0
    _
  %s9 = ssub.s32 1, %s7
  %s10 = scalar_select 0, %s9, %s7
  $region1: #{tpu_custom_call.1} parent=0
    #allocation2 [shape = 'u8[65536]{0}', space=vmem, size = 0x10000, scoped, tag = 'input window, operand 0']
    #allocation3 [shape = 'u8[131072]{0}', space=vmem, size = 0x20000, scoped, tag = 'output window, operand 0']
    #allocation4 [shape = 's32[2]{0}', space=sflag, size = 0x8, scoped, tag = 'scoped memory for tpu_custom_call.1']
    %11 = vsyncpa [#allocation4], 0
    %s12 = scalar_lea.sflag [#allocation4], 1
    %13 = vsyncpa %s12, 0
    loop: start=0, step=1, limit=6
    $region2: #{tpu_custom_call.1} parent=1 // loop_pre_header
      _
    $region3: #{tpu_custom_call.1} parent=1 // loop_header
      %s15 = sphi 0, %s19
      %p16 = scmp.ge.s32.totalorder %s15, 6
      %s22 = sphi 0, %s34
      %s23 = sphi 0, %s30
      %s24 = sphi 0, %s22
      %s25 = sphi 0, %s23
      %s26 = sphi 0, %s24
      %s27 = sphi 0, %s25
      %s39 = sphi 0, %s41
      %s42 = sphi 0, %s39
      %s43 = sphi 0, %s42
      %s59 = sphi 0, %s43
      %s65 = sphi 0, %s67
      %s68 = sphi 0, %s65
      %s69 = sphi 0, %s68
      %s85 = sphi 0, %s69
      %s91 = sphi 0, %s93
      %s94 = sphi 0, %s91
      %s95 = sphi 0, %s94
      %s111 = sphi 0, %s95
      %s115 = sphi 0, %s115
      %s117 = sphi 0, %s115
      %s118 = sphi 0, %s117
      %s132 = sphi 0, %s118
      %s136 = sphi 0, %s136
      %s138 = sphi 0, %s136
      %s139 = sphi 0, %s138
      %s153 = sphi 0, %s139
      %s157 = sphi 0, %s157
      %s159 = sphi 0, %s157
      %s160 = sphi 0, %s159
      %s174 = sphi 0, %s160
      %s180 = sphi 0, %s182
      %s183 = sphi 0, %s180
      %s184 = sphi 0, %s183
      %s200 = sphi 0, %s184
    $region4: #{tpu_custom_call.1} parent=1 // loop_header_branch
      %18 = sbr.rel (%p16) target = $region8
    $region5: #{tpu_custom_call.1} parent=1 // loop_body
      %s20 = ssub.s32 %s15, 1
      %s21 = ssub.s32 %s15, 2
      %s28 = sadd.s32 1, %s23
      %p29 = scmp.ge.s32.totalorder %s28, 2
      %s30 = scalar_select %p29, 0, %s28
      %s31 = sadd.s32 1, %s22
      %s32 = scalar_select %p29, %s31, %s22
      %p33 = scmp.ge.s32.totalorder %s32, 2
      %s34 = scalar_select %p33, 0, %s32
      %s35 = ssub.s32 %s22, %s34
      %s36 = ssub.s32 %s23, %s30
      %s37 = sor.u32 %s35, %s36
      %p38 = scmp.eq.s32.totalorder %s37, 0
      %s40 = sadd.s32 %s39, 1
      %s41 = scalar_select %p38, %s39, %s40
      %p44 = pneg %p38
      %p45 = scmp.eq.s32.totalorder %s15, 3
      %p46 = por %p44, %p45
      %p47 = scmp.ne.s32.totalorder %s39, %s42
      %p48 = scmp.eq.s32.totalorder %s15, 0
      %p49 = por %p47, %p48
      %p50 = scmp.ne.s32.totalorder %s39, %s42
      %p51 = scmp.eq.s32.totalorder %s20, 3
      %p52 = por %p50, %p51
      %p53 = scmp.ne.s32.totalorder %s42, %s43
      %p54 = scmp.eq.s32.totalorder %s20, 0
      %p55 = por %p53, %p54
      %p56 = scmp.ne.s32.totalorder %s42, %s43
      %p57 = scmp.eq.s32.totalorder %s21, 3
      %p58 = por %p56, %p57
      %p60 = scmp.ne.s32.totalorder %s43, %s59
      %p61 = scmp.eq.s32.totalorder %s21, 0
      %p62 = por %p60, %p61
      %s63 = ssub.s32 %s23, %s30
      %p64 = scmp.eq.s32.totalorder %s63, 0
      %s66 = sadd.s32 %s65, 1
      %s67 = scalar_select %p64, %s65, %s66
      %p70 = pneg %p64
      %p71 = scmp.eq.s32.totalorder %s15, 3
      %p72 = por %p70, %p71
      %p73 = scmp.ne.s32.totalorder %s65, %s68
      %p74 = scmp.eq.s32.totalorder %s15, 0
      %p75 = por %p73, %p74
      %p76 = scmp.ne.s32.totalorder %s65, %s68
      %p77 = scmp.eq.s32.totalorder %s20, 3
      %p78 = por %p76, %p77
      %p79 = scmp.ne.s32.totalorder %s68, %s69
      %p80 = scmp.eq.s32.totalorder %s20, 0
      %p81 = por %p79, %p80
      %p82 = scmp.ne.s32.totalorder %s68, %s69
      %p83 = scmp.eq.s32.totalorder %s21, 3
      %p84 = por %p82, %p83
      %p86 = scmp.ne.s32.totalorder %s69, %s85
      %p87 = scmp.eq.s32.totalorder %s21, 0
      %p88 = por %p86, %p87
      %s89 = ssub.s32 %s22, %s34
      %p90 = scmp.eq.s32.totalorder %s89, 0
      %s92 = sadd.s32 %s91, 1
      %s93 = scalar_select %p90, %s91, %s92
      %p96 = pneg %p90
      %p97 = scmp.eq.s32.totalorder %s15, 3
      %p98 = por %p96, %p97
      %p99 = scmp.ne.s32.totalorder %s91, %s94
      %p100 = scmp.eq.s32.totalorder %s15, 0
      %p101 = por %p99, %p100
      %p102 = scmp.ne.s32.totalorder %s91, %s94
      %p103 = scmp.eq.s32.totalorder %s20, 3
      %p104 = por %p102, %p103
      %p105 = scmp.ne.s32.totalorder %s94, %s95
      %p106 = scmp.eq.s32.totalorder %s20, 0
      %p107 = por %p105, %p106
      %p108 = scmp.ne.s32.totalorder %s94, %s95
      %p109 = scmp.eq.s32.totalorder %s21, 3
      %p110 = por %p108, %p109
      %p112 = scmp.ne.s32.totalorder %s95, %s111
      %p113 = scmp.eq.s32.totalorder %s21, 0
      %p114 = por %p112, %p113
      %s116 = sadd.s32 %s115, 1
      %p119 = scmp.eq.s32.totalorder %s15, 3
      %p120 = scmp.ne.s32.totalorder %s115, %s117
      %p121 = scmp.eq.s32.totalorder %s15, 0
      %p122 = por %p120, %p121
      %p123 = scmp.ne.s32.totalorder %s115, %s117
      %p124 = scmp.eq.s32.totalorder %s20, 3
      %p125 = por %p123, %p124
      %p126 = scmp.ne.s32.totalorder %s117, %s118
      %p127 = scmp.eq.s32.totalorder %s20, 0
      %p128 = por %p126, %p127
      %p129 = scmp.ne.s32.totalorder %s117, %s118
      %p130 = scmp.eq.s32.totalorder %s21, 3
      %p131 = por %p129, %p130
      %p133 = scmp.ne.s32.totalorder %s118, %s132
      %p134 = scmp.eq.s32.totalorder %s21, 0
      %p135 = por %p133, %p134
      %s137 = sadd.s32 %s136, 1
      %p140 = scmp.eq.s32.totalorder %s15, 3
      %p141 = scmp.ne.s32.totalorder %s136, %s138
      %p142 = scmp.eq.s32.totalorder %s15, 0
      %p143 = por %p141, %p142
      %p144 = scmp.ne.s32.totalorder %s136, %s138
      %p145 = scmp.eq.s32.totalorder %s20, 3
      %p146 = por %p144, %p145
      %p147 = scmp.ne.s32.totalorder %s138, %s139
      %p148 = scmp.eq.s32.totalorder %s20, 0
      %p149 = por %p147, %p148
      %p150 = scmp.ne.s32.totalorder %s138, %s139
      %p151 = scmp.eq.s32.totalorder %s21, 3
      %p152 = por %p150, %p151
      %p154 = scmp.ne.s32.totalorder %s139, %s153
      %p155 = scmp.eq.s32.totalorder %s21, 0
      %p156 = por %p154, %p155
      %s158 = sadd.s32 %s157, 1
      %p161 = scmp.eq.s32.totalorder %s15, 3
      %p162 = scmp.ne.s32.totalorder %s157, %s159
      %p163 = scmp.eq.s32.totalorder %s15, 0
      %p164 = por %p162, %p163
      %p165 = scmp.ne.s32.totalorder %s157, %s159
      %p166 = scmp.eq.s32.totalorder %s20, 3
      %p167 = por %p165, %p166
      %p168 = scmp.ne.s32.totalorder %s159, %s160
      %p169 = scmp.eq.s32.totalorder %s20, 0
      %p170 = por %p168, %p169
      %p171 = scmp.ne.s32.totalorder %s159, %s160
      %p172 = scmp.eq.s32.totalorder %s21, 3
      %p173 = por %p171, %p172
      %p175 = scmp.ne.s32.totalorder %s160, %s174
      %p176 = scmp.eq.s32.totalorder %s21, 0
      %p177 = por %p175, %p176
      %s178 = ssub.s32 %s22, %s34
      %p179 = scmp.eq.s32.totalorder %s178, 0
      %s181 = sadd.s32 %s180, 1
      %s182 = scalar_select %p179, %s180, %s181
      %p185 = pneg %p179
      %p186 = scmp.eq.s32.totalorder %s15, 3
      %p187 = por %p185, %p186
      %p188 = scmp.ne.s32.totalorder %s180, %s183
      %p189 = scmp.eq.s32.totalorder %s15, 0
      %p190 = por %p188, %p189
      %p191 = scmp.ne.s32.totalorder %s180, %s183
      %p192 = scmp.eq.s32.totalorder %s20, 3
      %p193 = por %p191, %p192
      %p194 = scmp.ne.s32.totalorder %s183, %s184
      %p195 = scmp.eq.s32.totalorder %s20, 0
      %p196 = por %p194, %p195
      %p197 = scmp.ne.s32.totalorder %s183, %s184
      %p198 = scmp.eq.s32.totalorder %s21, 3
      %p199 = por %p197, %p198
      %p201 = scmp.ne.s32.totalorder %s184, %s200
      %p202 = scmp.eq.s32.totalorder %s21, 0
      %p203 = por %p201, %p202
      %p204 = scmp.le.s32.totalorder 1, %s15
      %p205 = scmp.lt.s32.totalorder %s15, 5
      %p206 = pnand %p204, %p205
      %p207 = pneg %p206
      // Predicated region
      $region9: #{tpu_custom_call.1} parent=5 // pred_check
        _
      $region10: #{tpu_custom_call.1} parent=5 // pred_check_branch
        %209 = sbr.rel (%p206) target = $region12
      $region11: #{tpu_custom_call.1} parent=5 // pred_region
        %s210 = ssub.s32 %s15, 1
        // Predicated region
        $region13: #{tpu_custom_call.1} parent=11 // pred_check
          %p211 = pneg %p128
        $region14: #{tpu_custom_call.1} parent=11 // pred_check_branch
          %213 = sbr.rel (%p211) target = $region16
        $region15: #{tpu_custom_call.1} parent=11 // pred_region
          _
        $region16: #{tpu_custom_call.1} parent=11 // pred_fallthru
          _
        // Predicated region
        $region17: #{tpu_custom_call.1} parent=11 // pred_check
          %p214 = pneg %p149
        $region18: #{tpu_custom_call.1} parent=11 // pred_check_branch
          %216 = sbr.rel (%p214) target = $region20
        $region19: #{tpu_custom_call.1} parent=11 // pred_region
          _
        $region20: #{tpu_custom_call.1} parent=11 // pred_fallthru
          _
        // Predicated region
        $region21: #{tpu_custom_call.1} parent=11 // pred_check
          %p217 = pneg %p170
        $region22: #{tpu_custom_call.1} parent=11 // pred_check_branch
          %219 = sbr.rel (%p217) target = $region24
        $region23: #{tpu_custom_call.1} parent=11 // pred_region
          _
        $region24: #{tpu_custom_call.1} parent=11 // pred_fallthru
          _
      $region12: #{tpu_custom_call.1} parent=5 // pred_fallthru
        _
      %p220 = scmp.lt.s32.totalorder %s15, 4
      // Predicated region
      $region25: #{tpu_custom_call.1} parent=5 // pred_check
        %p221 = pneg %p220
      $region26: #{tpu_custom_call.1} parent=5 // pred_check_branch
        %223 = sbr.rel (%p221) target = $region28
      $region27: #{tpu_custom_call.1} parent=5 // pred_region
        // Predicated region
        $region29: #{tpu_custom_call.1} parent=27 // pred_check
          %p224 = pneg %p49
        $region30: #{tpu_custom_call.1} parent=27 // pred_check_branch
          %226 = sbr.rel (%p224) target = $region32
        $region31: #{tpu_custom_call.1} parent=27 // pred_region
          %s227 = sand.u32 %s39, 1
          %s228 = sand.u32 %s39, 1
          %s229 = smul.addr %s228, 64
          %s230 = scalar_lea.vmem [#allocation2], %s229
          %s231 = smul.u32 16, %s22
          %s232 = smul.addr %s231, 2
          %s233 = sadd.s32 %s23, %s232
          %s234 = smul.addr %s233, 4
          %s235 = scalar_lea.vmem %s0, %s234
          // Predicated region
          $region33: #{tpu_custom_call.1} parent=31 // pred_check
            _
          $region34: #{tpu_custom_call.1} parent=31 // pred_check_branch
            %237 = sbr.rel (0) target = $region36
          $region35: #{tpu_custom_call.1} parent=31 // pred_region
            // Predicated region
            $region37: #{tpu_custom_call.1} parent=35 // pred_check
              _
            $region38: #{tpu_custom_call.1} parent=35 // pred_check_branch
              %239 = sbr.rel target = $region40
            $region39: #{tpu_custom_call.1} parent=35 // pred_region
              // Predicated region
              $region52: #{tpu_custom_call.1} parent=39 // pred_check
                _
              $region53: #{tpu_custom_call.1} parent=39 // pred_check_branch
                %285 = sbr.rel (0) target = $region55
              $region54: #{tpu_custom_call.1} parent=39 // pred_region
                loop: start=0, step=1, limit=1
                $region56: #{tpu_custom_call.1} parent=54 // loop_pre_header
                  _
                $region57: #{tpu_custom_call.1} parent=54 // loop_header
                  %s287 = sphi 0, %s291
                  %p288 = scmp.ge.s32.totalorder %s287, 1
                  %s292 = sphi %s235, %s235
                  %s293 = sphi %s230, %s230
                $region58: #{tpu_custom_call.1} parent=54 // loop_header_branch
                  %290 = sbr.rel (%p288) target = $region62
                $region59: #{tpu_custom_call.1} parent=54 // loop_body
                  _
                $region60: #{tpu_custom_call.1} parent=54 // loop_footer
                  %s291 = sadd.s32 1, %s287
                $region61: #{tpu_custom_call.1} parent=54 // loop_footer_branch
                  %286 = sbr.rel target = $region57
                $region62: #{tpu_custom_call.1} parent=54 // loop_exit
                  _
                %s295 = ssub.s32 16, 1
                loop: start=0, step=1, limit=1
                $region63: #{tpu_custom_call.1} parent=54 // loop_pre_header
                  _
                $region64: #{tpu_custom_call.1} parent=54 // loop_header
                  %s297 = sphi 0, %s301
                  %p298 = scmp.ge.s32.totalorder %s297, 1
                  %s302 = sphi %s235, %s235
                  %s303 = sphi %s230, %s230
                $region65: #{tpu_custom_call.1} parent=54 // loop_header_branch
                  %300 = sbr.rel (%p298) target = $region69
                $region66: #{tpu_custom_call.1} parent=54 // loop_body
                  %v304 = vld [vmem:[%s302] sm:%s295]
                  %305 = vst [vmem:[%s303] sm:%s295] %v304
                  %v306 = vld [vmem:[%s302 + $0x8] sm:%s295]
                  %307 = vst [vmem:[%s303 + $0x4] sm:%s295] %v306
                  %v308 = vld [vmem:[%s302 + $0x10] sm:%s295]
                  %309 = vst [vmem:[%s303 + $0x8] sm:%s295] %v308
                  %v310 = vld [vmem:[%s302 + $0x18] sm:%s295]
                  %311 = vst [vmem:[%s303 + $0xc] sm:%s295] %v310
                  %v312 = vld [vmem:[%s302 + $0x20] sm:%s295]
                  %313 = vst [vmem:[%s303 + $0x10] sm:%s295] %v312
                  %v314 = vld [vmem:[%s302 + $0x28] sm:%s295]
                  %315 = vst [vmem:[%s303 + $0x14] sm:%s295] %v314
                  %v316 = vld [vmem:[%s302 + $0x30] sm:%s295]
                  %317 = vst [vmem:[%s303 + $0x18] sm:%s295] %v316
                  %v318 = vld [vmem:[%s302 + $0x38] sm:%s295]
                  %319 = vst [vmem:[%s303 + $0x1c] sm:%s295] %v318
                  %v320 = vld [vmem:[%s302 + $0x40] sm:%s295]
                  %321 = vst [vmem:[%s303 + $0x20] sm:%s295] %v320
                  %v322 = vld [vmem:[%s302 + $0x48] sm:%s295]
                  %323 = vst [vmem:[%s303 + $0x24] sm:%s295] %v322
                  %v324 = vld [vmem:[%s302 + $0x50] sm:%s295]
                  %325 = vst [vmem:[%s303 + $0x28] sm:%s295] %v324
                  %v326 = vld [vmem:[%s302 + $0x58] sm:%s295]
                  %327 = vst [vmem:[%s303 + $0x2c] sm:%s295] %v326
                  %v328 = vld [vmem:[%s302 + $0x60] sm:%s295]
                  %329 = vst [vmem:[%s303 + $0x30] sm:%s295] %v328
                  %v330 = vld [vmem:[%s302 + $0x68] sm:%s295]
                  %331 = vst [vmem:[%s303 + $0x34] sm:%s295] %v330
                  %v332 = vld [vmem:[%s302 + $0x70] sm:%s295]
                  %333 = vst [vmem:[%s303 + $0x38] sm:%s295] %v332
                  %v334 = vld [vmem:[%s302 + $0x78] sm:%s295]
                  %335 = vst [vmem:[%s303 + $0x3c] sm:%s295] %v334
                $region67: #{tpu_custom_call.1} parent=54 // loop_footer
                  %s301 = sadd.s32 1, %s297
                $region68: #{tpu_custom_call.1} parent=54 // loop_footer_branch
                  %296 = sbr.rel target = $region64
                $region69: #{tpu_custom_call.1} parent=54 // loop_exit
                  _
              $region55: #{tpu_custom_call.1} parent=39 // pred_fallthru
                _
            $region40: #{tpu_custom_call.1} parent=35 // pred_fallthru
              _
            // Predicated region
            $region41: #{tpu_custom_call.1} parent=35 // pred_check
              _
            $region42: #{tpu_custom_call.1} parent=35 // pred_check_branch
              %241 = sbr.rel (0) target = $region44
            $region43: #{tpu_custom_call.1} parent=35 // pred_region
              %s243 = ssub.s32 16, 1
              loop: start=0, step=1, limit=1
              $region45: #{tpu_custom_call.1} parent=43 // loop_pre_header
                _
              $region46: #{tpu_custom_call.1} parent=43 // loop_header
                %s245 = sphi 0, %s249
                %p246 = scmp.ge.s32.totalorder %s245, 1
                %s250 = sphi %s235, %s235
                %s251 = sphi %s230, %s230
              $region47: #{tpu_custom_call.1} parent=43 // loop_header_branch
                %248 = sbr.rel (%p246) target = $region51
              $region48: #{tpu_custom_call.1} parent=43 // loop_body
                %v252 = vld [vmem:[%s250] sm:%s243]
                %253 = vst [vmem:[%s251] sm:%s243] %v252
                %v254 = vld [vmem:[%s250 + $0x8] sm:%s243]
                %255 = vst [vmem:[%s251 + $0x4] sm:%s243] %v254
                %v256 = vld [vmem:[%s250 + $0x10] sm:%s243]
                %257 = vst [vmem:[%s251 + $0x8] sm:%s243] %v256
                %v258 = vld [vmem:[%s250 + $0x18] sm:%s243]
                %259 = vst [vmem:[%s251 + $0xc] sm:%s243] %v258
                %v260 = vld [vmem:[%s250 + $0x20] sm:%s243]
                %261 = vst [vmem:[%s251 + $0x10] sm:%s243] %v260
                %v262 = vld [vmem:[%s250 + $0x28] sm:%s243]
                %263 = vst [vmem:[%s251 + $0x14] sm:%s243] %v262
                %v264 = vld [vmem:[%s250 + $0x30] sm:%s243]
                %265 = vst [vmem:[%s251 + $0x18] sm:%s243] %v264
                %v266 = vld [vmem:[%s250 + $0x38] sm:%s243]
                %267 = vst [vmem:[%s251 + $0x1c] sm:%s243] %v266
                %v268 = vld [vmem:[%s250 + $0x40] sm:%s243]
                %269 = vst [vmem:[%s251 + $0x20] sm:%s243] %v268
                %v270 = vld [vmem:[%s250 + $0x48] sm:%s243]
                %271 = vst [vmem:[%s251 + $0x24] sm:%s243] %v270
                %v272 = vld [vmem:[%s250 + $0x50] sm:%s243]
                %273 = vst [vmem:[%s251 + $0x28] sm:%s243] %v272
                %v274 = vld [vmem:[%s250 + $0x58] sm:%s243]
                %275 = vst [vmem:[%s251 + $0x2c] sm:%s243] %v274
                %v276 = vld [vmem:[%s250 + $0x60] sm:%s243]
                %277 = vst [vmem:[%s251 + $0x30] sm:%s243] %v276
                %v278 = vld [vmem:[%s250 + $0x68] sm:%s243]
                %279 = vst [vmem:[%s251 + $0x34] sm:%s243] %v278
                %v280 = vld [vmem:[%s250 + $0x70] sm:%s243]
                %281 = vst [vmem:[%s251 + $0x38] sm:%s243] %v280
                %v282 = vld [vmem:[%s250 + $0x78] sm:%s243]
                %283 = vst [vmem:[%s251 + $0x3c] sm:%s243] %v282
              $region49: #{tpu_custom_call.1} parent=43 // loop_footer
                %s249 = sadd.s32 1, %s245
              $region50: #{tpu_custom_call.1} parent=43 // loop_footer_branch
                %244 = sbr.rel target = $region46
              $region51: #{tpu_custom_call.1} parent=43 // loop_exit
                _
            $region44: #{tpu_custom_call.1} parent=35 // pred_fallthru
              _
          $region36: #{tpu_custom_call.1} parent=31 // pred_fallthru
            _
          %336 = vnop
        $region32: #{tpu_custom_call.1} parent=27 // pred_fallthru
          _
        // Predicated region
        $region70: #{tpu_custom_call.1} parent=27 // pred_check
          %p337 = pneg %p75
        $region71: #{tpu_custom_call.1} parent=27 // pred_check_branch
          %339 = sbr.rel (%p337) target = $region73
        $region72: #{tpu_custom_call.1} parent=27 // pred_region
          %s340 = smul.u32 16, %s23
          %p341 = scmp.lt.s32.totalorder %s340, 31
          %s342 = scalar_select %p341, %s340, 31
          %s343 = smul.addr %s342, 8
          %s344 = scalar_lea.vmem %s1, %s343
          %s345 = smul.u32 16, %s23
        $region73: #{tpu_custom_call.1} parent=27 // pred_fallthru
          _
        // Predicated region
        $region74: #{tpu_custom_call.1} parent=27 // pred_check
          %p346 = pneg %p101
        $region75: #{tpu_custom_call.1} parent=27 // pred_check_branch
          %348 = sbr.rel (%p346) target = $region77
        $region76: #{tpu_custom_call.1} parent=27 // pred_region
          %s349 = smul.u32 16, %s22
          %p350 = scmp.lt.s32.totalorder %s349, 31
          %s351 = scalar_select %p350, %s349, 31
          %s352 = smul.addr %s351, 8
          %s353 = scalar_lea.vmem %s2, %s352
          %s354 = smul.u32 16, %s22
        $region77: #{tpu_custom_call.1} parent=27 // pred_fallthru
          _
      $region28: #{tpu_custom_call.1} parent=5 // pred_fallthru
        _
      %p355 = scmp.le.s32.totalorder 1, %s15
      %p356 = scmp.lt.s32.totalorder %s15, 5
      %p357 = pnand %p355, %p356
      %p358 = pneg %p357
      // Predicated region
      $region78: #{tpu_custom_call.1} parent=5 // pred_check
        _
      $region79: #{tpu_custom_call.1} parent=5 // pred_check_branch
        %360 = sbr.rel (%p357) target = $region81
      $region80: #{tpu_custom_call.1} parent=5 // pred_region
        %s361 = ssub.s32 %s15, 1
        %s362 = sand.u32 %s42, 1
        %s363 = sand.u32 %s42, 1
        %s364 = smul.addr %s363, 64
        %s365 = scalar_lea.vmem [#allocation2], %s364
        // Predicated region
        $region82: #{tpu_custom_call.1} parent=80 // pred_check
          %p366 = pneg %p55
        $region83: #{tpu_custom_call.1} parent=80 // pred_check_branch
          %368 = sbr.rel (%p366) target = $region85
        $region84: #{tpu_custom_call.1} parent=80 // pred_region
          _
        $region85: #{tpu_custom_call.1} parent=80 // pred_fallthru
          _
        %s369 = sand.u32 %s42, 1
        %s370 = sand.u32 %s42, 1
        %s371 = smul.addr %s370, 64
        %s372 = scalar_lea.vmem [#allocation2], %s371
        %p373 = pneg %p55
        %p374 = pneg %p52
        %s375 = smul.u32 16, %s25
        %p376 = scmp.lt.s32.totalorder %s375, 31
        %s377 = scalar_select %p376, %s375, 31
        %s378 = smul.addr %s377, 8
        %s379 = scalar_lea.vmem %s1, %s378
        %p380 = pneg %p81
        %p381 = pneg %p78
        %s382 = smul.u32 16, %s24
        %p383 = scmp.lt.s32.totalorder %s382, 31
        %s384 = scalar_select %p383, %s382, 31
        %s385 = smul.addr %s384, 8
        %s386 = scalar_lea.vmem %s2, %s385
        %p387 = pneg %p107
        %p388 = pneg %p104
        %p389 = pneg %p128
        %p390 = pneg %p125
        %p391 = pneg %p149
        %p392 = pneg %p146
        %p393 = pneg %p170
        %p394 = pneg %p167
        %p395 = pneg %p196
        %p396 = pneg %p193
        %s397 = sand.u32 %s183, 1
        %s398 = scalar_lea.sflag [#allocation4], %s397
        %s399 = sand.u32 %s183, 1
        %s400 = smul.addr %s399, 128
        %s401 = scalar_lea.vmem [#allocation3], %s400
        %s402 = smul.u32 16, %s24
        %s403 = smul.u32 16, %s25
        %p404 = scmp.lt.s32.totalorder %s403, 31
        %s405 = scalar_select %p404, %s403, 31
        %s406 = smul.addr %s405, 8
        %s407 = scalar_lea.vmem %s1, %s406
        %s408 = smul.u32 16, %s25
        %s409 = smul.u32 16, %s24
        %p410 = scmp.lt.s32.totalorder %s409, 31
        %s411 = scalar_select %p410, %s409, 31
        %s412 = smul.addr %s411, 8
        %s413 = scalar_lea.vmem %s2, %s412
        %s414 = smul.u32 16, %s24
        %s415 = smul.u32 16, %s24
        %p416 = scmp.eq.s32.totalorder %s25, 0
        // Predicated region
        $region86: #{tpu_custom_call.1} parent=80 // pred_check
          %p417 = pneg %p416
        $region87: #{tpu_custom_call.1} parent=80 // pred_check_branch
          %419 = sbr.rel (%p417) target = $region89
        $region88: #{tpu_custom_call.1} parent=80 // pred_region
          %420 = vst [vmem:[%s401] sm:$0xff] 0.0
          %421 = vst [vmem:[%s401 + $0x8] sm:$0xff] 0.0
          %422 = vst [vmem:[%s401 + $0x10] sm:$0xff] 0.0
          %423 = vst [vmem:[%s401 + $0x18] sm:$0xff] 0.0
          %424 = vst [vmem:[%s401 + $0x20] sm:$0xff] 0.0
          %425 = vst [vmem:[%s401 + $0x28] sm:$0xff] 0.0
          %426 = vst [vmem:[%s401 + $0x30] sm:$0xff] 0.0
          %427 = vst [vmem:[%s401 + $0x38] sm:$0xff] 0.0
          %428 = vst [vmem:[%s401 + $0x40] sm:$0xff] 0.0
          %429 = vst [vmem:[%s401 + $0x48] sm:$0xff] 0.0
          %430 = vst [vmem:[%s401 + $0x50] sm:$0xff] 0.0
          %431 = vst [vmem:[%s401 + $0x58] sm:$0xff] 0.0
          %432 = vst [vmem:[%s401 + $0x60] sm:$0xff] 0.0
          %433 = vst [vmem:[%s401 + $0x68] sm:$0xff] 0.0
          %434 = vst [vmem:[%s401 + $0x70] sm:$0xff] 0.0
          %435 = vst [vmem:[%s401 + $0x78] sm:$0xff] 0.0
        $region89: #{tpu_custom_call.1} parent=80 // pred_fallthru
          _
        %v436 = vld [vmem:[%s407] sm:$0xff]
        %v437 = vld [vmem:[%s407 + $0x8] sm:$0xff]
        %v438 = vld [vmem:[%s407 + $0x10] sm:$0xff]
        %v439 = vld [vmem:[%s407 + $0x18] sm:$0xff]
        %v440 = vld [vmem:[%s407 + $0x20] sm:$0xff]
        %v441 = vld [vmem:[%s407 + $0x28] sm:$0xff]
        %v442 = vld [vmem:[%s407 + $0x30] sm:$0xff]
        %v443 = vld [vmem:[%s407 + $0x38] sm:$0xff]
        %v444 = vld [vmem:[%s407 + $0x40] sm:$0xff]
        %v445 = vld [vmem:[%s407 + $0x48] sm:$0xff]
        %v446 = vld [vmem:[%s407 + $0x50] sm:$0xff]
        %v447 = vld [vmem:[%s407 + $0x58] sm:$0xff]
        %v448 = vld [vmem:[%s407 + $0x60] sm:$0xff]
        %v449 = vld [vmem:[%s407 + $0x68] sm:$0xff]
        %v450 = vld [vmem:[%s407 + $0x70] sm:$0xff]
        %v451 = vld [vmem:[%s407 + $0x78] sm:$0xff]
        %v452 = vld [vmem:[%s3] sm:$0xff]
        %v453 = vld [vmem:[%s3 + $0x8] sm:$0xff]
        %v454 = vld [vmem:[%s3 + $0x10] sm:$0xff]
        %v455 = vld [vmem:[%s3 + $0x18] sm:$0xff]
        %vm456 = vcmask 261120
        %v458 = vsel %vm456, %v436, 0
        %v461 = vsel %vm456, %v437, 0
        %v464 = vsel %vm456, %v438, 0
        %v467 = vsel %vm456, %v439, 0
        %v470 = vsel %vm456, %v440, 0
        %v473 = vsel %vm456, %v441, 0
        %v476 = vsel %vm456, %v442, 0
        %v479 = vsel %vm456, %v443, 0
        %v482 = vsel %vm456, %v444, 0
        %v485 = vsel %vm456, %v445, 0
        %v488 = vsel %vm456, %v446, 0
        %v491 = vsel %vm456, %v447, 0
        %v494 = vsel %vm456, %v448, 0
        %v497 = vsel %vm456, %v449, 0
        %v500 = vsel %vm456, %v450, 0
        %v503 = vsel %vm456, %v451, 0
        %505 = vmatpush.msra.mxu0 0.0
        %506 = vmatpush.msra.mxu0 0.0
        %507 = vmatpush.msra.mxu0 0.0
        %508 = vmatpush.msra.mxu0 0.0
        %509 = vmatpush.msra.mxu0 0.0
        %510 = vmatpush.msra.mxu0 0.0
        %511 = vmatpush.msra.mxu0 0.0
        %512 = vmatpush.msra.mxu0 0.0
        %513 = vmatpush.msra.mxu0 0.0
        %514 = vmatpush.msra.mxu0 0.0
        %515 = vmatpush.msra.mxu0 0.0
        %516 = vmatpush.msra.mxu0 0.0
        %517 = vmatpush.msra.mxu0 %v455
        %518 = vmatpush.msra.mxu0 %v454
        %519 = vmatpush.msra.mxu0 %v453
        %520 = vmatpush.msra.mxu0 %v452
        %521 = vmatmul.f32.gmra.mxu0 %v458
        %v522 = vpop.f32.mrf.mxu0
        %v523 = vadd.f32 0.0, %v522
        %524 = vmatmul.f32.gmra.mxu0 %v461
        %v525 = vpop.f32.mrf.mxu0
        %v526 = vadd.f32 0.0, %v525
        %527 = vmatmul.f32.gmra.mxu0 %v464
        %v528 = vpop.f32.mrf.mxu0
        %v529 = vadd.f32 0.0, %v528
        %530 = vmatmul.f32.gmra.mxu0 %v467
        %v531 = vpop.f32.mrf.mxu0
        %v532 = vadd.f32 0.0, %v531
        %533 = vmatmul.f32.gmra.mxu0 %v470
        %v534 = vpop.f32.mrf.mxu0
        %v535 = vadd.f32 0.0, %v534
        %536 = vmatmul.f32.gmra.mxu0 %v473
        %v537 = vpop.f32.mrf.mxu0
        %v538 = vadd.f32 0.0, %v537
        %539 = vmatmul.f32.gmra.mxu0 %v476
        %v540 = vpop.f32.mrf.mxu0
        %v541 = vadd.f32 0.0, %v540
        %542 = vmatmul.f32.gmra.mxu0 %v479
        %v543 = vpop.f32.mrf.mxu0
        %v544 = vadd.f32 0.0, %v543
        %545 = vmatmul.f32.gmra.mxu0 %v482
        %v546 = vpop.f32.mrf.mxu0
        %v547 = vadd.f32 0.0, %v546
        %548 = vmatmul.f32.gmra.mxu0 %v485
        %v549 = vpop.f32.mrf.mxu0
        %v550 = vadd.f32 0.0, %v549
        %551 = vmatmul.f32.gmra.mxu0 %v488
        %v552 = vpop.f32.mrf.mxu0
        %v553 = vadd.f32 0.0, %v552
        %554 = vmatmul.f32.gmra.mxu0 %v491
        %v555 = vpop.f32.mrf.mxu0
        %v556 = vadd.f32 0.0, %v555
        %557 = vmatmul.f32.gmra.mxu0 %v494
        %v558 = vpop.f32.mrf.mxu0
        %v559 = vadd.f32 0.0, %v558
        %560 = vmatmul.f32.gmra.mxu0 %v497
        %v561 = vpop.f32.mrf.mxu0
        %v562 = vadd.f32 0.0, %v561
        %563 = vmatmul.f32.gmra.mxu0 %v500
        %v564 = vpop.f32.mrf.mxu0
        %v565 = vadd.f32 0.0, %v564
        %566 = vmatmul.f32.gmra.mxu0 %v503
        %v567 = vpop.f32.mrf.mxu0
        %v568 = vadd.f32 0.0, %v567
        %569 = vdwg.mxu0
        %v570 = vld [vmem:[%s401] sm:$0xff]
        %v571 = vld [vmem:[%s401 + $0x8] sm:$0xff]
        %v572 = vld [vmem:[%s401 + $0x10] sm:$0xff]
        %v573 = vld [vmem:[%s401 + $0x18] sm:$0xff]
        %v574 = vld [vmem:[%s401 + $0x20] sm:$0xff]
        %v575 = vld [vmem:[%s401 + $0x28] sm:$0xff]
        %v576 = vld [vmem:[%s401 + $0x30] sm:$0xff]
        %v577 = vld [vmem:[%s401 + $0x38] sm:$0xff]
        %v578 = vld [vmem:[%s401 + $0x40] sm:$0xff]
        %v579 = vld [vmem:[%s401 + $0x48] sm:$0xff]
        %v580 = vld [vmem:[%s401 + $0x50] sm:$0xff]
        %v581 = vld [vmem:[%s401 + $0x58] sm:$0xff]
        %v582 = vld [vmem:[%s401 + $0x60] sm:$0xff]
        %v583 = vld [vmem:[%s401 + $0x68] sm:$0xff]
        %v584 = vld [vmem:[%s401 + $0x70] sm:$0xff]
        %v585 = vld [vmem:[%s401 + $0x78] sm:$0xff]
        %v586 = vld [vmem:[%s365] sm:$0xf]
        %v587 = vld [vmem:[%s365 + $0x4] sm:$0xf]
        %v588 = vld [vmem:[%s365 + $0x8] sm:$0xf]
        %v589 = vld [vmem:[%s365 + $0xc] sm:$0xf]
        %v590 = vld [vmem:[%s365 + $0x10] sm:$0xf]
        %v591 = vld [vmem:[%s365 + $0x14] sm:$0xf]
        %v592 = vld [vmem:[%s365 + $0x18] sm:$0xf]
        %v593 = vld [vmem:[%s365 + $0x1c] sm:$0xf]
        %v594 = vld [vmem:[%s365 + $0x20] sm:$0xf]
        %v595 = vld [vmem:[%s365 + $0x24] sm:$0xf]
        %v596 = vld [vmem:[%s365 + $0x28] sm:$0xf]
        %v597 = vld [vmem:[%s365 + $0x2c] sm:$0xf]
        %v598 = vld [vmem:[%s365 + $0x30] sm:$0xf]
        %v599 = vld [vmem:[%s365 + $0x34] sm:$0xf]
        %v600 = vld [vmem:[%s365 + $0x38] sm:$0xf]
        %v601 = vld [vmem:[%s365 + $0x3c] sm:$0xf]
        %v602 = vpack.c.bf16 %v526, %v523
        %v603 = vpack.c.bf16 %v532, %v529
        %v604 = vpack.c.bf16 %v538, %v535
        %v605 = vpack.c.bf16 %v544, %v541
        %v606 = vpack.c.bf16 %v550, %v547
        %v607 = vpack.c.bf16 %v556, %v553
        %v608 = vpack.c.bf16 %v562, %v559
        %v609 = vpack.c.bf16 %v568, %v565
        %v626 = vunpack.c.l.b16 %v586
        %v627 = vunpack.c.l.b16 %v587
        %v628 = vunpack.c.l.b16 %v588
        %v629 = vunpack.c.l.b16 %v589
        %v630 = vunpack.c.l.b16 %v590
        %v631 = vunpack.c.l.b16 %v591
        %v632 = vunpack.c.l.b16 %v592
        %v633 = vunpack.c.l.b16 %v593
        %v634 = vunpack.c.l.b16 %v594
        %v635 = vunpack.c.l.b16 %v595
        %v636 = vunpack.c.l.b16 %v596
        %v637 = vunpack.c.l.b16 %v597
        %v638 = vunpack.c.l.b16 %v598
        %v639 = vunpack.c.l.b16 %v599
        %v640 = vunpack.c.l.b16 %v600
        %v641 = vunpack.c.l.b16 %v601
        %v642 = vpack.c.b16 %v627, %v626
        %v643 = vpack.c.b16 %v629, %v628
        %v644 = vpack.c.b16 %v631, %v630
        %v645 = vpack.c.b16 %v633, %v632
        %v646 = vpack.c.b16 %v635, %v634
        %v647 = vpack.c.b16 %v637, %v636
        %v648 = vpack.c.b16 %v639, %v638
        %v649 = vpack.c.b16 %v641, %v640
        %658 = vmatpush.bf16.msra.mxu0 %v609
        %659 = vmatpush.bf16.msra.mxu0 %v608
        %660 = vmatpush.bf16.msra.mxu0 %v607
        %661 = vmatpush.bf16.msra.mxu0 %v606
        %662 = vmatpush.bf16.msra.mxu0 %v605
        %663 = vmatpush.bf16.msra.mxu0 %v604
        %664 = vmatpush.bf16.msra.mxu0 %v603
        %665 = vmatpush.bf16.msra.mxu0 %v602
        %666 = vmatmul.bf16.gmra.mxu0 %v642
        %v667 = vpop.f32.mrf.mxu0
        %v668 = vadd.f32 0.0, %v667
        %v669 = vpop.f32.mrf.mxu0
        %v670 = vadd.f32 0.0, %v669
        %671 = vmatmul.bf16.gmra.mxu0 %v643
        %v672 = vpop.f32.mrf.mxu0
        %v673 = vadd.f32 0.0, %v672
        %v674 = vpop.f32.mrf.mxu0
        %v675 = vadd.f32 0.0, %v674
        %676 = vmatmul.bf16.gmra.mxu0 %v644
        %v677 = vpop.f32.mrf.mxu0
        %v678 = vadd.f32 0.0, %v677
        %v679 = vpop.f32.mrf.mxu0
        %v680 = vadd.f32 0.0, %v679
        %681 = vmatmul.bf16.gmra.mxu0 %v645
        %v682 = vpop.f32.mrf.mxu0
        %v683 = vadd.f32 0.0, %v682
        %v684 = vpop.f32.mrf.mxu0
        %v685 = vadd.f32 0.0, %v684
        %686 = vmatmul.bf16.gmra.mxu0 %v646
        %v687 = vpop.f32.mrf.mxu0
        %v688 = vadd.f32 0.0, %v687
        %v689 = vpop.f32.mrf.mxu0
        %v690 = vadd.f32 0.0, %v689
        %691 = vmatmul.bf16.gmra.mxu0 %v647
        %v692 = vpop.f32.mrf.mxu0
        %v693 = vadd.f32 0.0, %v692
        %v694 = vpop.f32.mrf.mxu0
        %v695 = vadd.f32 0.0, %v694
        %696 = vmatmul.bf16.gmra.mxu0 %v648
        %v697 = vpop.f32.mrf.mxu0
        %v698 = vadd.f32 0.0, %v697
        %v699 = vpop.f32.mrf.mxu0
        %v700 = vadd.f32 0.0, %v699
        %701 = vmatmul.bf16.gmra.mxu0 %v649
        %v702 = vpop.f32.mrf.mxu0
        %v703 = vadd.f32 0.0, %v702
        %v704 = vpop.f32.mrf.mxu0
        %v705 = vadd.f32 0.0, %v704
        %706 = vdwg.mxu0
        %v707 = vadd.f32 %v570, %v668
        %v708 = vadd.f32 %v571, %v670
        %v709 = vadd.f32 %v572, %v673
        %v710 = vadd.f32 %v573, %v675
        %v711 = vadd.f32 %v574, %v678
        %v712 = vadd.f32 %v575, %v680
        %v713 = vadd.f32 %v576, %v683
        %v714 = vadd.f32 %v577, %v685
        %v715 = vadd.f32 %v578, %v688
        %v716 = vadd.f32 %v579, %v690
        %v717 = vadd.f32 %v580, %v693
        %v718 = vadd.f32 %v581, %v695
        %v719 = vadd.f32 %v582, %v698
        %v720 = vadd.f32 %v583, %v700
        %v721 = vadd.f32 %v584, %v703
        %v722 = vadd.f32 %v585, %v705
        %723 = vst [vmem:[%s401] sm:$0xff] %v707
        %724 = vst [vmem:[%s401 + $0x8] sm:$0xff] %v708
        %725 = vst [vmem:[%s401 + $0x10] sm:$0xff] %v709
        %726 = vst [vmem:[%s401 + $0x18] sm:$0xff] %v710
        %727 = vst [vmem:[%s401 + $0x20] sm:$0xff] %v711
        %728 = vst [vmem:[%s401 + $0x28] sm:$0xff] %v712
        %729 = vst [vmem:[%s401 + $0x30] sm:$0xff] %v713
        %730 = vst [vmem:[%s401 + $0x38] sm:$0xff] %v714
        %731 = vst [vmem:[%s401 + $0x40] sm:$0xff] %v715
        %732 = vst [vmem:[%s401 + $0x48] sm:$0xff] %v716
        %733 = vst [vmem:[%s401 + $0x50] sm:$0xff] %v717
        %734 = vst [vmem:[%s401 + $0x58] sm:$0xff] %v718
        %735 = vst [vmem:[%s401 + $0x60] sm:$0xff] %v719
        %736 = vst [vmem:[%s401 + $0x68] sm:$0xff] %v720
        %737 = vst [vmem:[%s401 + $0x70] sm:$0xff] %v721
        %738 = vst [vmem:[%s401 + $0x78] sm:$0xff] %v722
        %p739 = scmp.eq.s32.totalorder %s25, 1
        // Predicated region
        $region90: #{tpu_custom_call.1} parent=80 // pred_check
          %p740 = pneg %p739
        $region91: #{tpu_custom_call.1} parent=80 // pred_check_branch
          %742 = sbr.rel (%p740) target = $region93
        $region92: #{tpu_custom_call.1} parent=80 // pred_region
          %v743 = vld [vmem:[%s5] sm:$0xff]
          %v744 = vld [vmem:[%s401] sm:$0xff]
          %v745 = vld [vmem:[%s401 + $0x8] sm:$0xff]
          %v746 = vld [vmem:[%s401 + $0x10] sm:$0xff]
          %v747 = vld [vmem:[%s401 + $0x18] sm:$0xff]
          %v748 = vld [vmem:[%s401 + $0x20] sm:$0xff]
          %v749 = vld [vmem:[%s401 + $0x28] sm:$0xff]
          %v750 = vld [vmem:[%s401 + $0x30] sm:$0xff]
          %v751 = vld [vmem:[%s401 + $0x38] sm:$0xff]
          %v752 = vld [vmem:[%s401 + $0x40] sm:$0xff]
          %v753 = vld [vmem:[%s401 + $0x48] sm:$0xff]
          %v754 = vld [vmem:[%s401 + $0x50] sm:$0xff]
          %v755 = vld [vmem:[%s401 + $0x58] sm:$0xff]
          %v756 = vld [vmem:[%s401 + $0x60] sm:$0xff]
          %v757 = vld [vmem:[%s401 + $0x68] sm:$0xff]
          %v758 = vld [vmem:[%s401 + $0x70] sm:$0xff]
          %v759 = vld [vmem:[%s401 + $0x78] sm:$0xff]
          %v760 = vperm.slane %v743, 0
          %v761 = vadd.f32 %v744, %v760
          %v762 = vadd.f32 %v745, %v760
          %v763 = vadd.f32 %v746, %v760
          %v764 = vadd.f32 %v747, %v760
          %v765 = vadd.f32 %v748, %v760
          %v766 = vadd.f32 %v749, %v760
          %v767 = vadd.f32 %v750, %v760
          %v768 = vadd.f32 %v751, %v760
          %v769 = vadd.f32 %v752, %v760
          %v770 = vadd.f32 %v753, %v760
          %v771 = vadd.f32 %v754, %v760
          %v772 = vadd.f32 %v755, %v760
          %v773 = vadd.f32 %v756, %v760
          %v774 = vadd.f32 %v757, %v760
          %v775 = vadd.f32 %v758, %v760
          %v776 = vadd.f32 %v759, %v760
          %v777 = vld [vmem:[%s413] sm:$0xff]
          %v778 = vld [vmem:[%s413 + $0x8] sm:$0xff]
          %v779 = vld [vmem:[%s413 + $0x10] sm:$0xff]
          %v780 = vld [vmem:[%s413 + $0x18] sm:$0xff]
          %v781 = vld [vmem:[%s413 + $0x20] sm:$0xff]
          %v782 = vld [vmem:[%s413 + $0x28] sm:$0xff]
          %v783 = vld [vmem:[%s413 + $0x30] sm:$0xff]
          %v784 = vld [vmem:[%s413 + $0x38] sm:$0xff]
          %v785 = vld [vmem:[%s413 + $0x40] sm:$0xff]
          %v786 = vld [vmem:[%s413 + $0x48] sm:$0xff]
          %v787 = vld [vmem:[%s413 + $0x50] sm:$0xff]
          %v788 = vld [vmem:[%s413 + $0x58] sm:$0xff]
          %v789 = vld [vmem:[%s413 + $0x60] sm:$0xff]
          %v790 = vld [vmem:[%s413 + $0x68] sm:$0xff]
          %v791 = vld [vmem:[%s413 + $0x70] sm:$0xff]
          %v792 = vld [vmem:[%s413 + $0x78] sm:$0xff]
          %v793 = vld [vmem:[%s4] sm:$0xff]
          %v794 = vld [vmem:[%s4 + $0x8] sm:$0xff]
          %v795 = vld [vmem:[%s4 + $0x10] sm:$0xff]
          %v796 = vld [vmem:[%s4 + $0x18] sm:$0xff]
          %v798 = vsel %vm456, %v777, 0
          %v801 = vsel %vm456, %v778, 0
          %v804 = vsel %vm456, %v779, 0
          %v807 = vsel %vm456, %v780, 0
          %v810 = vsel %vm456, %v781, 0
          %v813 = vsel %vm456, %v782, 0
          %v816 = vsel %vm456, %v783, 0
          %v819 = vsel %vm456, %v784, 0
          %v822 = vsel %vm456, %v785, 0
          %v825 = vsel %vm456, %v786, 0
          %v828 = vsel %vm456, %v787, 0
          %v831 = vsel %vm456, %v788, 0
          %v834 = vsel %vm456, %v789, 0
          %v837 = vsel %vm456, %v790, 0
          %v840 = vsel %vm456, %v791, 0
          %v843 = vsel %vm456, %v792, 0
          %845 = vmatpush.msra.mxu0 0.0
          %846 = vmatpush.msra.mxu0 0.0
          %847 = vmatpush.msra.mxu0 0.0
          %848 = vmatpush.msra.mxu0 0.0
          %849 = vmatpush.msra.mxu0 0.0
          %850 = vmatpush.msra.mxu0 0.0
          %851 = vmatpush.msra.mxu0 0.0
          %852 = vmatpush.msra.mxu0 0.0
          %853 = vmatpush.msra.mxu0 0.0
          %854 = vmatpush.msra.mxu0 0.0
          %855 = vmatpush.msra.mxu0 0.0
          %856 = vmatpush.msra.mxu0 0.0
          %857 = vmatpush.msra.mxu0 %v796
          %858 = vmatpush.msra.mxu0 %v795
          %859 = vmatpush.msra.mxu0 %v794
          %860 = vmatpush.msra.mxu0 %v793
          %861 = vmatmul.f32.gmra.mxu0 %v798
          %v862 = vpop.f32.mrf.mxu0
          %v863 = vadd.f32 0.0, %v862
          %864 = vmatmul.f32.gmra.mxu0 %v801
          %v865 = vpop.f32.mrf.mxu0
          %v866 = vadd.f32 0.0, %v865
          %867 = vmatmul.f32.gmra.mxu0 %v804
          %v868 = vpop.f32.mrf.mxu0
          %v869 = vadd.f32 0.0, %v868
          %870 = vmatmul.f32.gmra.mxu0 %v807
          %v871 = vpop.f32.mrf.mxu0
          %v872 = vadd.f32 0.0, %v871
          %873 = vmatmul.f32.gmra.mxu0 %v810
          %v874 = vpop.f32.mrf.mxu0
          %v875 = vadd.f32 0.0, %v874
          %876 = vmatmul.f32.gmra.mxu0 %v813
          %v877 = vpop.f32.mrf.mxu0
          %v878 = vadd.f32 0.0, %v877
          %879 = vmatmul.f32.gmra.mxu0 %v816
          %v880 = vpop.f32.mrf.mxu0
          %v881 = vadd.f32 0.0, %v880
          %882 = vmatmul.f32.gmra.mxu0 %v819
          %v883 = vpop.f32.mrf.mxu0
          %v884 = vadd.f32 0.0, %v883
          %885 = vmatmul.f32.gmra.mxu0 %v822
          %v886 = vpop.f32.mrf.mxu0
          %v887 = vadd.f32 0.0, %v886
          %888 = vmatmul.f32.gmra.mxu0 %v825
          %v889 = vpop.f32.mrf.mxu0
          %v890 = vadd.f32 0.0, %v889
          %891 = vmatmul.f32.gmra.mxu0 %v828
          %v892 = vpop.f32.mrf.mxu0
          %v893 = vadd.f32 0.0, %v892
          %894 = vmatmul.f32.gmra.mxu0 %v831
          %v895 = vpop.f32.mrf.mxu0
          %v896 = vadd.f32 0.0, %v895
          %897 = vmatmul.f32.gmra.mxu0 %v834
          %v898 = vpop.f32.mrf.mxu0
          %v899 = vadd.f32 0.0, %v898
          %900 = vmatmul.f32.gmra.mxu0 %v837
          %v901 = vpop.f32.mrf.mxu0
          %v902 = vadd.f32 0.0, %v901
          %903 = vmatmul.f32.gmra.mxu0 %v840
          %v904 = vpop.f32.mrf.mxu0
          %v905 = vadd.f32 0.0, %v904
          %906 = vmatmul.f32.gmra.mxu0 %v843
          %v907 = vpop.f32.mrf.mxu0
          %v908 = vadd.f32 0.0, %v907
          %909 = vdwg.mxu0
          %v910 = vadd.f32 %v761, %v863
          %v911 = vadd.f32 %v762, %v866
          %v912 = vadd.f32 %v763, %v869
          %v913 = vadd.f32 %v764, %v872
          %v914 = vadd.f32 %v765, %v875
          %v915 = vadd.f32 %v766, %v878
          %v916 = vadd.f32 %v767, %v881
          %v917 = vadd.f32 %v768, %v884
          %v918 = vadd.f32 %v769, %v887
          %v919 = vadd.f32 %v770, %v890
          %v920 = vadd.f32 %v771, %v893
          %v921 = vadd.f32 %v772, %v896
          %v922 = vadd.f32 %v773, %v899
          %v923 = vadd.f32 %v774, %v902
          %v924 = vadd.f32 %v775, %v905
          %v925 = vadd.f32 %v776, %v908
          %v926 = vperm.slane %v743, 1
          %v927 = vadd.f32 %v910, %v926
          %v928 = vadd.f32 %v911, %v926
          %v929 = vadd.f32 %v912, %v926
          %v930 = vadd.f32 %v913, %v926
          %v931 = vadd.f32 %v914, %v926
          %v932 = vadd.f32 %v915, %v926
          %v933 = vadd.f32 %v916, %v926
          %v934 = vadd.f32 %v917, %v926
          %v935 = vadd.f32 %v918, %v926
          %v936 = vadd.f32 %v919, %v926
          %v937 = vadd.f32 %v920, %v926
          %v938 = vadd.f32 %v921, %v926
          %v939 = vadd.f32 %v922, %v926
          %v940 = vadd.f32 %v923, %v926
          %v941 = vadd.f32 %v924, %v926
          %v942 = vadd.f32 %v925, %v926
          %v943 = vlaneseq
          %v944 = vand.u32 %v943, 127
          %vm945 = vcmp.lt.s32.totalorder %v944, 16
          %v946 = vsel %vm945, %v927, 0.0
          %v947 = vsel %vm945, %v928, 0.0
          %v948 = vsel %vm945, %v929, 0.0
          %v949 = vsel %vm945, %v930, 0.0
          %v950 = vsel %vm945, %v931, 0.0
          %v951 = vsel %vm945, %v932, 0.0
          %v952 = vsel %vm945, %v933, 0.0
          %v953 = vsel %vm945, %v934, 0.0
          %v954 = vsel %vm945, %v935, 0.0
          %v955 = vsel %vm945, %v936, 0.0
          %v956 = vsel %vm945, %v937, 0.0
          %v957 = vsel %vm945, %v938, 0.0
          %v958 = vsel %vm945, %v939, 0.0
          %v959 = vsel %vm945, %v940, 0.0
          %v960 = vsel %vm945, %v941, 0.0
          %v961 = vsel %vm945, %v942, 0.0
          %962 = vadd.xlane.f32.xlu0 %v946
          %v963 = vpop.xlane.xlu0 %962
          %964 = vadd.xlane.f32.xlu0 %v947
          %v965 = vpop.xlane.xlu0 %964
          %966 = vadd.xlane.f32.xlu0 %v948
          %v967 = vpop.xlane.xlu0 %966
          %968 = vadd.xlane.f32.xlu0 %v949
          %v969 = vpop.xlane.xlu0 %968
          %970 = vadd.xlane.f32.xlu0 %v950
          %v971 = vpop.xlane.xlu0 %970
          %972 = vadd.xlane.f32.xlu0 %v951
          %v973 = vpop.xlane.xlu0 %972
          %974 = vadd.xlane.f32.xlu0 %v952
          %v975 = vpop.xlane.xlu0 %974
          %976 = vadd.xlane.f32.xlu0 %v953
          %v977 = vpop.xlane.xlu0 %976
          %978 = vadd.xlane.f32.xlu0 %v954
          %v979 = vpop.xlane.xlu0 %978
          %980 = vadd.xlane.f32.xlu0 %v955
          %v981 = vpop.xlane.xlu0 %980
          %982 = vadd.xlane.f32.xlu0 %v956
          %v983 = vpop.xlane.xlu0 %982
          %984 = vadd.xlane.f32.xlu0 %v957
          %v985 = vpop.xlane.xlu0 %984
          %986 = vadd.xlane.f32.xlu0 %v958
          %v987 = vpop.xlane.xlu0 %986
          %988 = vadd.xlane.f32.xlu0 %v959
          %v989 = vpop.xlane.xlu0 %988
          %990 = vadd.xlane.f32.xlu0 %v960
          %v991 = vpop.xlane.xlu0 %990
          %992 = vadd.xlane.f32.xlu0 %v961
          %v993 = vpop.xlane.xlu0 %992
          %v994 = vmul.f32 %v963, 0.0625
          %v995 = vmul.f32 %v965, 0.0625
          %v996 = vmul.f32 %v967, 0.0625
          %v997 = vmul.f32 %v969, 0.0625
          %v998 = vmul.f32 %v971, 0.0625
          %v999 = vmul.f32 %v973, 0.0625
          %v1000 = vmul.f32 %v975, 0.0625
          %v1001 = vmul.f32 %v977, 0.0625
          %v1002 = vmul.f32 %v979, 0.0625
          %v1003 = vmul.f32 %v981, 0.0625
          %v1004 = vmul.f32 %v983, 0.0625
          %v1005 = vmul.f32 %v985, 0.0625
          %v1006 = vmul.f32 %v987, 0.0625
          %v1007 = vmul.f32 %v989, 0.0625
          %v1008 = vmul.f32 %v991, 0.0625
          %v1009 = vmul.f32 %v993, 0.0625
          %v1010 = vsub.f32 %v927, %v994
          %v1011 = vsub.f32 %v928, %v995
          %v1012 = vsub.f32 %v929, %v996
          %v1013 = vsub.f32 %v930, %v997
          %v1014 = vsub.f32 %v931, %v998
          %v1015 = vsub.f32 %v932, %v999
          %v1016 = vsub.f32 %v933, %v1000
          %v1017 = vsub.f32 %v934, %v1001
          %v1018 = vsub.f32 %v935, %v1002
          %v1019 = vsub.f32 %v936, %v1003
          %v1020 = vsub.f32 %v937, %v1004
          %v1021 = vsub.f32 %v938, %v1005
          %v1022 = vsub.f32 %v939, %v1006
          %v1023 = vsub.f32 %v940, %v1007
          %v1024 = vsub.f32 %v941, %v1008
          %v1025 = vsub.f32 %v942, %v1009
          %v1026 = vsel %vm945, %v1010, 0.0
          %v1027 = vsel %vm945, %v1011, 0.0
          %v1028 = vsel %vm945, %v1012, 0.0
          %v1029 = vsel %vm945, %v1013, 0.0
          %v1030 = vsel %vm945, %v1014, 0.0
          %v1031 = vsel %vm945, %v1015, 0.0
          %v1032 = vsel %vm945, %v1016, 0.0
          %v1033 = vsel %vm945, %v1017, 0.0
          %v1034 = vsel %vm945, %v1018, 0.0
          %v1035 = vsel %vm945, %v1019, 0.0
          %v1036 = vsel %vm945, %v1020, 0.0
          %v1037 = vsel %vm945, %v1021, 0.0
          %v1038 = vsel %vm945, %v1022, 0.0
          %v1039 = vsel %vm945, %v1023, 0.0
          %v1040 = vsel %vm945, %v1024, 0.0
          %v1041 = vsel %vm945, %v1025, 0.0
          %v1042 = vmul.f32 %v1026, %v1026
          %v1043 = vmul.f32 %v1027, %v1027
          %v1044 = vmul.f32 %v1028, %v1028
          %v1045 = vmul.f32 %v1029, %v1029
          %v1046 = vmul.f32 %v1030, %v1030
          %v1047 = vmul.f32 %v1031, %v1031
          %v1048 = vmul.f32 %v1032, %v1032
          %v1049 = vmul.f32 %v1033, %v1033
          %v1050 = vmul.f32 %v1034, %v1034
          %v1051 = vmul.f32 %v1035, %v1035
          %v1052 = vmul.f32 %v1036, %v1036
          %v1053 = vmul.f32 %v1037, %v1037
          %v1054 = vmul.f32 %v1038, %v1038
          %v1055 = vmul.f32 %v1039, %v1039
          %v1056 = vmul.f32 %v1040, %v1040
          %v1057 = vmul.f32 %v1041, %v1041
          %1058 = vadd.xlane.f32.xlu0 %v1042
          %v1059 = vpop.xlane.xlu0 %1058
          %1060 = vadd.xlane.f32.xlu0 %v1043
          %v1061 = vpop.xlane.xlu0 %1060
          %1062 = vadd.xlane.f32.xlu0 %v1044
          %v1063 = vpop.xlane.xlu0 %1062
          %1064 = vadd.xlane.f32.xlu0 %v1045
          %v1065 = vpop.xlane.xlu0 %1064
          %1066 = vadd.xlane.f32.xlu0 %v1046
          %v1067 = vpop.xlane.xlu0 %1066
          %1068 = vadd.xlane.f32.xlu0 %v1047
          %v1069 = vpop.xlane.xlu0 %1068
          %1070 = vadd.xlane.f32.xlu0 %v1048
          %v1071 = vpop.xlane.xlu0 %1070
          %1072 = vadd.xlane.f32.xlu0 %v1049
          %v1073 = vpop.xlane.xlu0 %1072
          %1074 = vadd.xlane.f32.xlu0 %v1050
          %v1075 = vpop.xlane.xlu0 %1074
          %1076 = vadd.xlane.f32.xlu0 %v1051
          %v1077 = vpop.xlane.xlu0 %1076
          %1078 = vadd.xlane.f32.xlu0 %v1052
          %v1079 = vpop.xlane.xlu0 %1078
          %1080 = vadd.xlane.f32.xlu0 %v1053
          %v1081 = vpop.xlane.xlu0 %1080
          %1082 = vadd.xlane.f32.xlu0 %v1054
          %v1083 = vpop.xlane.xlu0 %1082
          %1084 = vadd.xlane.f32.xlu0 %v1055
          %v1085 = vpop.xlane.xlu0 %1084
          %1086 = vadd.xlane.f32.xlu0 %v1056
          %v1087 = vpop.xlane.xlu0 %1086
          %1088 = vadd.xlane.f32.xlu0 %v1057
          %v1089 = vpop.xlane.xlu0 %1088
          %v1090 = vmul.f32 %v1059, 0.0625
          %v1091 = vmul.f32 %v1061, 0.0625
          %v1092 = vmul.f32 %v1063, 0.0625
          %v1093 = vmul.f32 %v1065, 0.0625
          %v1094 = vmul.f32 %v1067, 0.0625
          %v1095 = vmul.f32 %v1069, 0.0625
          %v1096 = vmul.f32 %v1071, 0.0625
          %v1097 = vmul.f32 %v1073, 0.0625
          %v1098 = vmul.f32 %v1075, 0.0625
          %v1099 = vmul.f32 %v1077, 0.0625
          %v1100 = vmul.f32 %v1079, 0.0625
          %v1101 = vmul.f32 %v1081, 0.0625
          %v1102 = vmul.f32 %v1083, 0.0625
          %v1103 = vmul.f32 %v1085, 0.0625
          %v1104 = vmul.f32 %v1087, 0.0625
          %v1105 = vmul.f32 %v1089, 0.0625
          %v1106 = vadd.f32 %v1090, 1e-05
          %v1107 = vadd.f32 %v1091, 1e-05
          %v1108 = vadd.f32 %v1092, 1e-05
          %v1109 = vadd.f32 %v1093, 1e-05
          %v1110 = vadd.f32 %v1094, 1e-05
          %v1111 = vadd.f32 %v1095, 1e-05
          %v1112 = vadd.f32 %v1096, 1e-05
          %v1113 = vadd.f32 %v1097, 1e-05
          %v1114 = vadd.f32 %v1098, 1e-05
          %v1115 = vadd.f32 %v1099, 1e-05
          %v1116 = vadd.f32 %v1100, 1e-05
          %v1117 = vadd.f32 %v1101, 1e-05
          %v1118 = vadd.f32 %v1102, 1e-05
          %v1119 = vadd.f32 %v1103, 1e-05
          %v1120 = vadd.f32 %v1104, 1e-05
          %v1121 = vadd.f32 %v1105, 1e-05
          %v1122 = vrsqrt.pop %v1106
          %v1123 = vmul.f32 %v1122, %v1106
          %v1124 = vmul.f32 %v1123, %v1122
          %v1125 = vmul.f32 0.5, %v1124
          %v1126 = vsub.f32 1.5, %v1125
          %v1127 = vmul.f32 %v1122, %v1126
          %vm1128 = vweird.f32 %v1106
          %vm1129 = vweird.f32 %v1122
          %vm1130 = vmor %vm1128, %vm1129
          %v1131 = vsel %vm1130, %v1122, %v1127
          %v1132 = vrsqrt.pop %v1107
          %v1133 = vmul.f32 %v1132, %v1107
          %v1134 = vmul.f32 %v1133, %v1132
          %v1135 = vmul.f32 0.5, %v1134
          %v1136 = vsub.f32 1.5, %v1135
          %v1137 = vmul.f32 %v1132, %v1136
          %vm1138 = vweird.f32 %v1107
          %vm1139 = vweird.f32 %v1132
          %vm1140 = vmor %vm1138, %vm1139
          %v1141 = vsel %vm1140, %v1132, %v1137
          %v1142 = vrsqrt.pop %v1108
          %v1143 = vmul.f32 %v1142, %v1108
          %v1144 = vmul.f32 %v1143, %v1142
          %v1145 = vmul.f32 0.5, %v1144
          %v1146 = vsub.f32 1.5, %v1145
          %v1147 = vmul.f32 %v1142, %v1146
          %vm1148 = vweird.f32 %v1108
          %vm1149 = vweird.f32 %v1142
          %vm1150 = vmor %vm1148, %vm1149
          %v1151 = vsel %vm1150, %v1142, %v1147
          %v1152 = vrsqrt.pop %v1109
          %v1153 = vmul.f32 %v1152, %v1109
          %v1154 = vmul.f32 %v1153, %v1152
          %v1155 = vmul.f32 0.5, %v1154
          %v1156 = vsub.f32 1.5, %v1155
          %v1157 = vmul.f32 %v1152, %v1156
          %vm1158 = vweird.f32 %v1109
          %vm1159 = vweird.f32 %v1152
          %vm1160 = vmor %vm1158, %vm1159
          %v1161 = vsel %vm1160, %v1152, %v1157
          %v1162 = vrsqrt.pop %v1110
          %v1163 = vmul.f32 %v1162, %v1110
          %v1164 = vmul.f32 %v1163, %v1162
          %v1165 = vmul.f32 0.5, %v1164
          %v1166 = vsub.f32 1.5, %v1165
          %v1167 = vmul.f32 %v1162, %v1166
          %vm1168 = vweird.f32 %v1110
          %vm1169 = vweird.f32 %v1162
          %vm1170 = vmor %vm1168, %vm1169
          %v1171 = vsel %vm1170, %v1162, %v1167
          %v1172 = vrsqrt.pop %v1111
          %v1173 = vmul.f32 %v1172, %v1111
          %v1174 = vmul.f32 %v1173, %v1172
          %v1175 = vmul.f32 0.5, %v1174
          %v1176 = vsub.f32 1.5, %v1175
          %v1177 = vmul.f32 %v1172, %v1176
          %vm1178 = vweird.f32 %v1111
          %vm1179 = vweird.f32 %v1172
          %vm1180 = vmor %vm1178, %vm1179
          %v1181 = vsel %vm1180, %v1172, %v1177
          %v1182 = vrsqrt.pop %v1112
          %v1183 = vmul.f32 %v1182, %v1112
          %v1184 = vmul.f32 %v1183, %v1182
          %v1185 = vmul.f32 0.5, %v1184
          %v1186 = vsub.f32 1.5, %v1185
          %v1187 = vmul.f32 %v1182, %v1186
          %vm1188 = vweird.f32 %v1112
          %vm1189 = vweird.f32 %v1182
          %vm1190 = vmor %vm1188, %vm1189
          %v1191 = vsel %vm1190, %v1182, %v1187
          %v1192 = vrsqrt.pop %v1113
          %v1193 = vmul.f32 %v1192, %v1113
          %v1194 = vmul.f32 %v1193, %v1192
          %v1195 = vmul.f32 0.5, %v1194
          %v1196 = vsub.f32 1.5, %v1195
          %v1197 = vmul.f32 %v1192, %v1196
          %vm1198 = vweird.f32 %v1113
          %vm1199 = vweird.f32 %v1192
          %vm1200 = vmor %vm1198, %vm1199
          %v1201 = vsel %vm1200, %v1192, %v1197
          %v1202 = vrsqrt.pop %v1114
          %v1203 = vmul.f32 %v1202, %v1114
          %v1204 = vmul.f32 %v1203, %v1202
          %v1205 = vmul.f32 0.5, %v1204
          %v1206 = vsub.f32 1.5, %v1205
          %v1207 = vmul.f32 %v1202, %v1206
          %vm1208 = vweird.f32 %v1114
          %vm1209 = vweird.f32 %v1202
          %vm1210 = vmor %vm1208, %vm1209
          %v1211 = vsel %vm1210, %v1202, %v1207
          %v1212 = vrsqrt.pop %v1115
          %v1213 = vmul.f32 %v1212, %v1115
          %v1214 = vmul.f32 %v1213, %v1212
          %v1215 = vmul.f32 0.5, %v1214
          %v1216 = vsub.f32 1.5, %v1215
          %v1217 = vmul.f32 %v1212, %v1216
          %vm1218 = vweird.f32 %v1115
          %vm1219 = vweird.f32 %v1212
          %vm1220 = vmor %vm1218, %vm1219
          %v1221 = vsel %vm1220, %v1212, %v1217
          %v1222 = vrsqrt.pop %v1116
          %v1223 = vmul.f32 %v1222, %v1116
          %v1224 = vmul.f32 %v1223, %v1222
          %v1225 = vmul.f32 0.5, %v1224
          %v1226 = vsub.f32 1.5, %v1225
          %v1227 = vmul.f32 %v1222, %v1226
          %vm1228 = vweird.f32 %v1116
          %vm1229 = vweird.f32 %v1222
          %vm1230 = vmor %vm1228, %vm1229
          %v1231 = vsel %vm1230, %v1222, %v1227
          %v1232 = vrsqrt.pop %v1117
          %v1233 = vmul.f32 %v1232, %v1117
          %v1234 = vmul.f32 %v1233, %v1232
          %v1235 = vmul.f32 0.5, %v1234
          %v1236 = vsub.f32 1.5, %v1235
          %v1237 = vmul.f32 %v1232, %v1236
          %vm1238 = vweird.f32 %v1117
          %vm1239 = vweird.f32 %v1232
          %vm1240 = vmor %vm1238, %vm1239
          %v1241 = vsel %vm1240, %v1232, %v1237
          %v1242 = vrsqrt.pop %v1118
          %v1243 = vmul.f32 %v1242, %v1118
          %v1244 = vmul.f32 %v1243, %v1242
          %v1245 = vmul.f32 0.5, %v1244
          %v1246 = vsub.f32 1.5, %v1245
          %v1247 = vmul.f32 %v1242, %v1246
          %vm1248 = vweird.f32 %v1118
          %vm1249 = vweird.f32 %v1242
          %vm1250 = vmor %vm1248, %vm1249
          %v1251 = vsel %vm1250, %v1242, %v1247
          %v1252 = vrsqrt.pop %v1119
          %v1253 = vmul.f32 %v1252, %v1119
          %v1254 = vmul.f32 %v1253, %v1252
          %v1255 = vmul.f32 0.5, %v1254
          %v1256 = vsub.f32 1.5, %v1255
          %v1257 = vmul.f32 %v1252, %v1256
          %vm1258 = vweird.f32 %v1119
          %vm1259 = vweird.f32 %v1252
          %vm1260 = vmor %vm1258, %vm1259
          %v1261 = vsel %vm1260, %v1252, %v1257
          %v1262 = vrsqrt.pop %v1120
          %v1263 = vmul.f32 %v1262, %v1120
          %v1264 = vmul.f32 %v1263, %v1262
          %v1265 = vmul.f32 0.5, %v1264
          %v1266 = vsub.f32 1.5, %v1265
          %v1267 = vmul.f32 %v1262, %v1266
          %vm1268 = vweird.f32 %v1120
          %vm1269 = vweird.f32 %v1262
          %vm1270 = vmor %vm1268, %vm1269
          %v1271 = vsel %vm1270, %v1262, %v1267
          %v1272 = vrsqrt.pop %v1121
          %v1273 = vmul.f32 %v1272, %v1121
          %v1274 = vmul.f32 %v1273, %v1272
          %v1275 = vmul.f32 0.5, %v1274
          %v1276 = vsub.f32 1.5, %v1275
          %v1277 = vmul.f32 %v1272, %v1276
          %vm1278 = vweird.f32 %v1121
          %vm1279 = vweird.f32 %v1272
          %vm1280 = vmor %vm1278, %vm1279
          %v1281 = vsel %vm1280, %v1272, %v1277
          %v1282 = vmul.f32 %v1026, %v1131
          %v1283 = vmul.f32 %v1027, %v1141
          %v1284 = vmul.f32 %v1028, %v1151
          %v1285 = vmul.f32 %v1029, %v1161
          %v1286 = vmul.f32 %v1030, %v1171
          %v1287 = vmul.f32 %v1031, %v1181
          %v1288 = vmul.f32 %v1032, %v1191
          %v1289 = vmul.f32 %v1033, %v1201
          %v1290 = vmul.f32 %v1034, %v1211
          %v1291 = vmul.f32 %v1035, %v1221
          %v1292 = vmul.f32 %v1036, %v1231
          %v1293 = vmul.f32 %v1037, %v1241
          %v1294 = vmul.f32 %v1038, %v1251
          %v1295 = vmul.f32 %v1039, %v1261
          %v1296 = vmul.f32 %v1040, %v1271
          %v1297 = vmul.f32 %v1041, %v1281
          %v1298 = vperm.slane %v743, 2
          %v1299 = vmul.f32 %v1282, %v1298
          %v1300 = vmul.f32 %v1283, %v1298
          %v1301 = vmul.f32 %v1284, %v1298
          %v1302 = vmul.f32 %v1285, %v1298
          %v1303 = vmul.f32 %v1286, %v1298
          %v1304 = vmul.f32 %v1287, %v1298
          %v1305 = vmul.f32 %v1288, %v1298
          %v1306 = vmul.f32 %v1289, %v1298
          %v1307 = vmul.f32 %v1290, %v1298
          %v1308 = vmul.f32 %v1291, %v1298
          %v1309 = vmul.f32 %v1292, %v1298
          %v1310 = vmul.f32 %v1293, %v1298
          %v1311 = vmul.f32 %v1294, %v1298
          %v1312 = vmul.f32 %v1295, %v1298
          %v1313 = vmul.f32 %v1296, %v1298
          %v1314 = vmul.f32 %v1297, %v1298
          %v1315 = vperm.slane %v743, 3
          %v1316 = vadd.f32 %v1299, %v1315
          %v1317 = vadd.f32 %v1300, %v1315
          %v1318 = vadd.f32 %v1301, %v1315
          %v1319 = vadd.f32 %v1302, %v1315
          %v1320 = vadd.f32 %v1303, %v1315
          %v1321 = vadd.f32 %v1304, %v1315
          %v1322 = vadd.f32 %v1305, %v1315
          %v1323 = vadd.f32 %v1306, %v1315
          %v1324 = vadd.f32 %v1307, %v1315
          %v1325 = vadd.f32 %v1308, %v1315
          %v1326 = vadd.f32 %v1309, %v1315
          %v1327 = vadd.f32 %v1310, %v1315
          %v1328 = vadd.f32 %v1311, %v1315
          %v1329 = vadd.f32 %v1312, %v1315
          %v1330 = vadd.f32 %v1313, %v1315
          %v1331 = vadd.f32 %v1314, %v1315
          %1332 = vst [vmem:[%s401] sm:$0xff] %v1316
          %1333 = vst [vmem:[%s401 + $0x8] sm:$0xff] %v1317
          %1334 = vst [vmem:[%s401 + $0x10] sm:$0xff] %v1318
          %1335 = vst [vmem:[%s401 + $0x18] sm:$0xff] %v1319
          %1336 = vst [vmem:[%s401 + $0x20] sm:$0xff] %v1320
          %1337 = vst [vmem:[%s401 + $0x28] sm:$0xff] %v1321
          %1338 = vst [vmem:[%s401 + $0x30] sm:$0xff] %v1322
          %1339 = vst [vmem:[%s401 + $0x38] sm:$0xff] %v1323
          %1340 = vst [vmem:[%s401 + $0x40] sm:$0xff] %v1324
          %1341 = vst [vmem:[%s401 + $0x48] sm:$0xff] %v1325
          %1342 = vst [vmem:[%s401 + $0x50] sm:$0xff] %v1326
          %1343 = vst [vmem:[%s401 + $0x58] sm:$0xff] %v1327
          %1344 = vst [vmem:[%s401 + $0x60] sm:$0xff] %v1328
          %1345 = vst [vmem:[%s401 + $0x68] sm:$0xff] %v1329
          %1346 = vst [vmem:[%s401 + $0x70] sm:$0xff] %v1330
          %1347 = vst [vmem:[%s401 + $0x78] sm:$0xff] %v1331
        $region93: #{tpu_custom_call.1} parent=80 // pred_fallthru
          _
        %s1348 = sand.u32 %s183, 1
        %s1349 = scalar_lea.sflag [#allocation4], %s1348
        %s1350 = sand.u32 %s183, 1
        %s1351 = smul.addr %s1350, 128
        %s1352 = scalar_lea.vmem [#allocation3], %s1351
        // Predicated region
        $region94: #{tpu_custom_call.1} parent=80 // pred_check
          %p1353 = pneg %p193
        $region95: #{tpu_custom_call.1} parent=80 // pred_check_branch
          %1355 = sbr.rel (%p1353) target = $region97
        $region96: #{tpu_custom_call.1} parent=80 // pred_region
          %s1356 = smul.u32 16, %s24
          %1358 = vsyncadd %s1349, 0
          %s1359 = smul.addr %s1356, 8
          %s1360 = scalar_lea.hbm %s6, %s1359
          %s1361 = sshll.u32 %s1352, 4
          %s1362 = int_to_ptr.vmem [resolvable:$true] %s1361
          %s1363 = sshll.u32 %s1360, 4
          %s1364 = int_to_ptr.hbm [resolvable:$true] %s1363
          %1369 = dma.vmem_to_hbm [thread:$0]  %s1362, 2048, %s1364, %s1349, 128, 128, 8
        $region97: #{tpu_custom_call.1} parent=80 // pred_fallthru
          _
      $region81: #{tpu_custom_call.1} parent=5 // pred_fallthru
        _
      %p1370 = scmp.le.s32.totalorder 2, %s15
      // Predicated region
      $region98: #{tpu_custom_call.1} parent=5 // pred_check
        %p1371 = pneg %p1370
      $region99: #{tpu_custom_call.1} parent=5 // pred_check_branch
        %1373 = sbr.rel (%p1371) target = $region101
      $region100: #{tpu_custom_call.1} parent=5 // pred_region
        %s1374 = ssub.s32 %s15, 2
        // Predicated region
        $region102: #{tpu_custom_call.1} parent=100 // pred_check
          %p1375 = pneg %p199
        $region103: #{tpu_custom_call.1} parent=100 // pred_check_branch
          %1377 = sbr.rel (%p1375) target = $region105
        $region104: #{tpu_custom_call.1} parent=100 // pred_region
          %s1378 = sand.u32 %s184, 1
          %s1379 = scalar_lea.sflag [#allocation4], %s1378
          %s1380 = sand.u32 %s184, 1
          %s1381 = smul.addr %s1380, 128
          %s1382 = scalar_lea.vmem [#allocation3], %s1381
          %1384 = dma.done %s1379, 2048
        $region105: #{tpu_custom_call.1} parent=100 // pred_fallthru
          _
      $region101: #{tpu_custom_call.1} parent=5 // pred_fallthru
        _
    $region6: #{tpu_custom_call.1} parent=1 // loop_footer
      %s19 = sadd.s32 1, %s15
    $region7: #{tpu_custom_call.1} parent=1 // loop_footer_branch
      %14 = sbr.rel target = $region3
    $region8: #{tpu_custom_call.1} parent=1 // loop_exit
      _
    %1385 = vsyncpa [#allocation4], 1
    %s1386 = scalar_lea.sflag [#allocation4], 1
    %1387 = vsyncpa %s1386, 1

</llo_original>
